<compile_context>
chip_gen: v5e
topology: v5e:2x2
jax: 0.10.0
libtpu: 0.0.40
codegen_flags: <defaults>
</compile_context>

<pallas_src>
import functools

import numpy as np
import jax
import jax.numpy as jnp
from jax import lax
from jax.experimental import pallas as pl
from jax.experimental.pallas import tpu as pltpu


# ----------------------------------------------------------------------------
# Fused Pallas kernel: embeddings -> BiLSTM -> scorer -> batch-major reorder
# ----------------------------------------------------------------------------
def _en_labeler_kernel(
    # ids (time-major flattened, row = t*B + b)
    pre_ids_ref,      # (N, 1) int32
    word_ids_ref,     # (N, 1) int32
    # embedding tables
    pre_tab_ref,      # (Vp, E) f32
    word_tab_ref,     # (Vw, E) f32
    # LSTM input->gate weights, both directions lane-concatenated: [fwd | bwd]
    wih_pre_ref,      # (E, 8H)
    wih_word_ref,     # (E, 8H)
    # LSTM hidden->gate weights
    whh_f_ref,        # (H, 4H)
    whh_b_ref,        # (H, 4H)
    # combined biases (b_ih + b_hh), both directions: [fwd | bwd]
    b_fb_ref,         # (1, 8H)
    # fixed initial states
    h0_ref,           # (2, B, H)  dir 0 = forward, dir 1 = backward
    c0_ref,           # (2, B, H)
    # scorer
    w1_f_ref,         # (H, 300)   forward half of Linear(2H,300)^T
    w1_b_ref,         # (H, 300)   backward half
    b1_ref,           # (1, 300)
    w2_ref,           # (300, P)   lane-padded Linear(300,3)^T
    b2_ref,           # (1, P)
    # time-major -> batch-major row permutation
    perm_ref,         # (N, N) f32
    # output (batch-major rows, true output width)
    out_ref,          # (N, out_dim)
    # VMEM scratch
    gx_sc,            # (N, 8H)    hoisted input projections [fwd | bwd]
    outf_sc,          # (N, H)     forward hidden states (time-major)
    outb_sc,          # (N, H)     backward hidden states (time-major)
):
    N = out_ref.shape[0]
    B = h0_ref.shape[1]
    H = h0_ref.shape[2]
    S = N // B
    Vp = pre_tab_ref.shape[0]
    Vw = word_tab_ref.shape[0]
    f32 = jnp.float32

    # --- Embedding lookup via one-hot matmul (tiny vocab -> MXU-friendly). ---
    # word_dropout is identity in eval mode.
    pre_oh = (lax.broadcasted_iota(jnp.int32, (N, Vp), 1)
              == pre_ids_ref[...]).astype(f32)                      # (N, Vp)
    word_oh = (lax.broadcasted_iota(jnp.int32, (N, Vw), 1)
               == word_ids_ref[...]).astype(f32)                    # (N, Vw)
    emb_pre = jnp.dot(pre_oh, pre_tab_ref[...], preferred_element_type=f32)
    emb_word = jnp.dot(word_oh, word_tab_ref[...], preferred_element_type=f32)

    # --- Hoisted input projection: both directions in one (N, 8H) slab. ---
    gx_sc[...] = (
        jnp.dot(emb_pre, wih_pre_ref[...], preferred_element_type=f32)
        + jnp.dot(emb_word, wih_word_ref[...], preferred_element_type=f32)
        + b_fb_ref[...])

    w_hh_f = whh_f_ref[...]          # hoisted; reused by every unrolled step
    w_hh_b = whh_b_ref[...]

    def lstm_cell(gates, c_prev):
        # Full-width activations on the dense (B, 4H) = (B, 128) tile (EUP),
        # then cheap lane slices (PyTorch gate order i, f, g, o).
        sig = jax.nn.sigmoid(gates)
        th = jnp.tanh(gates)
        i_g = sig[:, 0:H]
        f_g = sig[:, H:2 * H]
        g_g = th[:, 2 * H:3 * H]
        o_g = sig[:, 3 * H:4 * H]
        c_new = f_g * c_prev + i_g * g_g
        h_new = o_g * jnp.tanh(c_new)
        return h_new, c_new

    h_f, c_f = h0_ref[0], c0_ref[0]
    h_b, c_b = h0_ref[1], c0_ref[1]

    # Fully unrolled at trace time (S is static) -> straight-line code with
    # static slice offsets; both directions interleaved for ILP.
    for t in range(S):
        rf = t * B
        g_f = gx_sc[rf:rf + B, 0:4 * H] + jnp.dot(
            h_f, w_hh_f, preferred_element_type=f32)
        h_f, c_f = lstm_cell(g_f, c_f)
        outf_sc[rf:rf + B, :] = h_f

        rb = (S - 1 - t) * B         # in-kernel time reversal, no jnp.flip
        g_b = gx_sc[rb:rb + B, 4 * H:8 * H] + jnp.dot(
            h_b, w_hh_b, preferred_element_type=f32)
        h_b, c_b = lstm_cell(g_b, c_b)
        outb_sc[rb:rb + B, :] = h_b

    # --- Scorer: Linear(2H,300) -> ReLU -> Linear(300,P padded). ---
    # out_dropout is identity in eval mode.
    hid = jnp.maximum(
        jnp.dot(outf_sc[...], w1_f_ref[...], preferred_element_type=f32)
        + jnp.dot(outb_sc[...], w1_b_ref[...], preferred_element_type=f32)
        + b1_ref[...], 0.0)                                        # (N, 300)
    scores = (jnp.dot(hid, w2_ref[...], preferred_element_type=f32)
              + b2_ref[...])                                       # (N, P)

    # --- Fused time-major -> batch-major reorder + drop lane padding. ---
    out_bm = jnp.dot(perm_ref[...], scores, preferred_element_type=f32)
    out_ref[...] = out_bm[:, :out_ref.shape[1]]


# ----------------------------------------------------------------------------
# Wrapper
# ----------------------------------------------------------------------------
_VMEM = pl.BlockSpec(memory_space=pltpu.MemorySpace.VMEM)
_LANE_PAD = 128   # lane-pad the last Linear for the matmul; kernel slices to 3


def init_params(key, *, word_vocab=50, pretrain_vocab=60,
                word_emb=300, pretrain_emb=300, hidden=32, batch=2):
    ks = jax.random.split(key, 20)
    H = hidden
    u = lambda k, shape, s=0.1: jax.random.uniform(k, shape, jnp.float32, -s, s)
    params = {
        "pretrained_embedding": u(ks[0], (pretrain_vocab, pretrain_emb), 1.0),
        "word_embedding": u(ks[1], (word_vocab, word_emb), 1.0),
        # LSTM weights stored pre-transposed, both directions lane-concatenated
        # [fwd 4H | bwd 4H].  The 600-dim input weight is split into its
        # pretrain-half / word-half rows (same math as the concatenated
        # PyTorch weight_ih; avoids any in-kernel concat).
        "w_ih_pre": u(ks[2], (pretrain_emb, 8 * H)),
        "w_ih_word": u(ks[3], (word_emb, 8 * H)),
        "w_hh_f": u(ks[4], (H, 4 * H)),
        "w_hh_b": u(ks[5], (H, 4 * H)),
        "b_fb": u(ks[6], (1, 8 * H)),          # (b_ih + b_hh), [fwd | bwd]
        # fixed initial bilstm state (randn in the PyTorch module)
        "h0": jax.random.normal(ks[7], (2, batch, H), jnp.float32),
        "c0": jax.random.normal(ks[8], (2, batch, H), jnp.float32),
        # scorer: Linear(2H,300) split into fwd/bwd halves, then Linear(300,3)
        "scorer_w1_f": u(ks[9], (H, 300)),
        "scorer_w1_b": u(ks[10], (H, 300)),
        "scorer_b1": u(ks[11], (1, 300)),
        "scorer_w2": u(ks[12], (300, 3)),
        "scorer_b2": u(ks[13], (1, 3)),
    }
    return params


@functools.partial(jax.jit)
def en_labeler_forward(params, word_ids, pretrain_ids):
    B, S = word_ids.shape
    N = B * S
    H = params["w_hh_f"].shape[0]
    out_dim = params["scorer_w2"].shape[1]
    P = _LANE_PAD

    # Time-major flattened ids (row = t*B + b), kept as (N, 1) for the one-hot
    # comparison inside the kernel.
    pre_tm = jnp.transpose(pretrain_ids).reshape(N, 1).astype(jnp.int32)
    word_tm = jnp.transpose(word_ids).reshape(N, 1).astype(jnp.int32)

    # Lane-pad the final Linear so its matmul stays on a dense 128-lane RHS.
    w2_pad = jnp.pad(params["scorer_w2"], ((0, 0), (0, P - out_dim)))
    b2_pad = jnp.pad(params["scorer_b2"], ((0, 0), (0, P - out_dim)))

    # Constant permutation: batch-major row i = b*S + t picks time-major row
    # t*B + b.  Built with numpy at trace time -> baked as a jaxpr constant.
    idx = np.arange(N)
    perm = np.zeros((N, N), np.float32)
    perm[idx, (idx % S) * B + (idx // S)] = 1.0

    inputs = (
        pre_tm, word_tm,
        params["pretrained_embedding"], params["word_embedding"],
        params["w_ih_pre"], params["w_ih_word"],
        params["w_hh_f"], params["w_hh_b"],
        params["b_fb"],
        params["h0"], params["c0"],
        params["scorer_w1_f"], params["scorer_w1_b"], params["scorer_b1"],
        w2_pad, b2_pad,
        jnp.asarray(perm),
    )

    # Single fused kernel; output is already batch-major and (N, 3): no
    # post-kernel XLA ops at all.
    return pl.pallas_call(
        _en_labeler_kernel,
        out_shape=jax.ShapeDtypeStruct((N, out_dim), jnp.float32),
        in_specs=[_VMEM] * len(inputs),
        out_specs=_VMEM,
        scratch_shapes=[
            pltpu.VMEM((N, 8 * H), jnp.float32),   # gates_x [fwd | bwd]
            pltpu.VMEM((N, H), jnp.float32),       # forward hidden states
            pltpu.VMEM((N, H), jnp.float32),       # backward hidden states
        ],
    )(*inputs)


# ----------------------------------------------------------------------------
if __name__ == "__main__":
    key = jax.random.PRNGKey(0)
    k_param, k_word, k_pre = jax.random.split(key, 3)

    BATCH, SEQ = 2, 8
    WORD_VOCAB, PRETRAIN_VOCAB = 50, 60
    HIDDEN = 32

    params = init_params(k_param, word_vocab=WORD_VOCAB,
                         pretrain_vocab=PRETRAIN_VOCAB,
                         hidden=HIDDEN, batch=BATCH)

    word_ids = jax.random.randint(k_word, (BATCH, SEQ), 0, WORD_VOCAB, jnp.int32)
    pretrain_ids = jax.random.randint(k_pre, (BATCH, SEQ), 0, PRETRAIN_VOCAB,
                                      jnp.int32)

    out = en_labeler_forward(params, word_ids, pretrain_ids)
    out = jax.block_until_ready(out)
    assert out.shape == (BATCH * SEQ, 3), out.shape
    assert bool(jnp.all(jnp.isfinite(out)))
    print("KERNEL_OK")
</pallas_src>

<mosaic_0001>
module attributes {stable_mosaic.version = 11 : i64} {
  func.func @_en_labeler_kernel(%arg0: memref<16x1xi32, #tpu.memory_space<vmem>>, %arg1: memref<16x1xi32, #tpu.memory_space<vmem>>, %arg2: memref<60x300xf32, #tpu.memory_space<vmem>>, %arg3: memref<50x300xf32, #tpu.memory_space<vmem>>, %arg4: memref<300x256xf32, #tpu.memory_space<vmem>>, %arg5: memref<300x256xf32, #tpu.memory_space<vmem>>, %arg6: memref<32x128xf32, #tpu.memory_space<vmem>>, %arg7: memref<32x128xf32, #tpu.memory_space<vmem>>, %arg8: memref<1x256xf32, #tpu.memory_space<vmem>>, %arg9: memref<2x2x32xf32, #tpu.memory_space<vmem>>, %arg10: memref<2x2x32xf32, #tpu.memory_space<vmem>>, %arg11: memref<32x300xf32, #tpu.memory_space<vmem>>, %arg12: memref<32x300xf32, #tpu.memory_space<vmem>>, %arg13: memref<1x300xf32, #tpu.memory_space<vmem>>, %arg14: memref<300x128xf32, #tpu.memory_space<vmem>>, %arg15: memref<1x128xf32, #tpu.memory_space<vmem>>, %arg16: memref<16x16xf32, #tpu.memory_space<vmem>>, %arg17: memref<16x3xf32, #tpu.memory_space<vmem>>, %arg18: memref<16x256xf32, #tpu.memory_space<vmem>>, %arg19: memref<16x32xf32, #tpu.memory_space<vmem>>, %arg20: memref<16x32xf32, #tpu.memory_space<vmem>>) attributes {dimension_semantics = [], scalar_prefetch = 0 : i64, scratch_operands = 3 : i64, tpu.core_type = #tpu.core_type<tc>} {
    %0 = tpu.iota {dimensions = array<i32: 1>} : vector<16x60xi32>
    %c0 = arith.constant 0 : index
    %c0_0 = arith.constant 0 : index
    %1 = vector.load %arg0[%c0, %c0_0] : memref<16x1xi32, #tpu.memory_space<vmem>>, vector<16x1xi32>
    %2 = vector.broadcast %1 : vector<16x1xi32> to vector<16x60xi32>
    %3 = arith.cmpi eq, %0, %2 : vector<16x60xi32>
    %4 = arith.extui %3 : vector<16x60xi1> to vector<16x60xi32>
    %5 = arith.sitofp %4 : vector<16x60xi32> to vector<16x60xf32>
    %6 = tpu.iota {dimensions = array<i32: 1>} : vector<16x50xi32>
    %c0_1 = arith.constant 0 : index
    %c0_2 = arith.constant 0 : index
    %7 = vector.load %arg1[%c0_1, %c0_2] : memref<16x1xi32, #tpu.memory_space<vmem>>, vector<16x1xi32>
    %8 = vector.broadcast %7 : vector<16x1xi32> to vector<16x50xi32>
    %9 = arith.cmpi eq, %6, %8 : vector<16x50xi32>
    %10 = arith.extui %9 : vector<16x50xi1> to vector<16x50xi32>
    %11 = arith.sitofp %10 : vector<16x50xi32> to vector<16x50xf32>
    %c0_3 = arith.constant 0 : index
    %c0_4 = arith.constant 0 : index
    %12 = vector.load %arg2[%c0_3, %c0_4] : memref<60x300xf32, #tpu.memory_space<vmem>>, vector<60x300xf32>
    %cst = arith.constant dense<0.000000e+00> : vector<16x300xf32>
    %13 = tpu.matmul %5, %12, %cst {dimension_numbers = #tpu.dot_dimension_numbers<[1], [0], [0], [1], [0, 0, 1, 1], [], []>} : vector<16x60xf32>, vector<60x300xf32>, vector<16x300xf32> -> vector<16x300xf32>
    %c0_5 = arith.constant 0 : index
    %c0_6 = arith.constant 0 : index
    %14 = vector.load %arg3[%c0_5, %c0_6] : memref<50x300xf32, #tpu.memory_space<vmem>>, vector<50x300xf32>
    %cst_7 = arith.constant dense<0.000000e+00> : vector<16x300xf32>
    %15 = tpu.matmul %11, %14, %cst_7 {dimension_numbers = #tpu.dot_dimension_numbers<[1], [0], [0], [1], [0, 0, 1, 1], [], []>} : vector<16x50xf32>, vector<50x300xf32>, vector<16x300xf32> -> vector<16x300xf32>
    %c0_8 = arith.constant 0 : index
    %c0_9 = arith.constant 0 : index
    %16 = vector.load %arg4[%c0_8, %c0_9] : memref<300x256xf32, #tpu.memory_space<vmem>>, vector<300x256xf32>
    %cst_10 = arith.constant dense<0.000000e+00> : vector<16x256xf32>
    %17 = tpu.matmul %13, %16, %cst_10 {dimension_numbers = #tpu.dot_dimension_numbers<[1], [0], [0], [1], [0, 0, 1, 1], [], []>} : vector<16x300xf32>, vector<300x256xf32>, vector<16x256xf32> -> vector<16x256xf32>
    %c0_11 = arith.constant 0 : index
    %c0_12 = arith.constant 0 : index
    %18 = vector.load %arg5[%c0_11, %c0_12] : memref<300x256xf32, #tpu.memory_space<vmem>>, vector<300x256xf32>
    %cst_13 = arith.constant dense<0.000000e+00> : vector<16x256xf32>
    %19 = tpu.matmul %15, %18, %cst_13 {dimension_numbers = #tpu.dot_dimension_numbers<[1], [0], [0], [1], [0, 0, 1, 1], [], []>} : vector<16x300xf32>, vector<300x256xf32>, vector<16x256xf32> -> vector<16x256xf32>
    %20 = arith.addf %17, %19 : vector<16x256xf32>
    %c0_14 = arith.constant 0 : index
    %c0_15 = arith.constant 0 : index
    %21 = vector.load %arg8[%c0_14, %c0_15] : memref<1x256xf32, #tpu.memory_space<vmem>>, vector<1x256xf32>
    %22 = vector.broadcast %21 : vector<1x256xf32> to vector<16x256xf32>
    %23 = arith.addf %20, %22 : vector<16x256xf32>
    %c0_16 = arith.constant 0 : index
    %c0_17 = arith.constant 0 : index
    %24 = vector.load %arg18[%c0_16, %c0_17] : memref<16x256xf32, #tpu.memory_space<vmem>>, vector<16x256xf32>
    tpu.vector_store %arg18[%c0_16, %c0_17], %23 {strides = array<i32>} : memref<16x256xf32, #tpu.memory_space<vmem>>, vector<16x256xf32>,
    %c0_18 = arith.constant 0 : index
    %c0_19 = arith.constant 0 : index
    %25 = vector.load %arg6[%c0_18, %c0_19] : memref<32x128xf32, #tpu.memory_space<vmem>>, vector<32x128xf32>
    %c0_20 = arith.constant 0 : index
    %c0_21 = arith.constant 0 : index
    %26 = vector.load %arg7[%c0_20, %c0_21] : memref<32x128xf32, #tpu.memory_space<vmem>>, vector<32x128xf32>
    %c0_22 = arith.constant 0 : index
    %c0_23 = arith.constant 0 : index
    %c0_24 = arith.constant 0 : index
    %27 = vector.load %arg9[%c0_22, %c0_23, %c0_24] : memref<2x2x32xf32, #tpu.memory_space<vmem>>, vector<1x2x32xf32>
    %28 = vector.shape_cast %27 : vector<1x2x32xf32> to vector<2x32xf32>
    %c0_25 = arith.constant 0 : index
    %c0_26 = arith.constant 0 : index
    %c0_27 = arith.constant 0 : index
    %29 = vector.load %arg10[%c0_25, %c0_26, %c0_27] : memref<2x2x32xf32, #tpu.memory_space<vmem>>, vector<1x2x32xf32>
    %30 = vector.shape_cast %29 : vector<1x2x32xf32> to vector<2x32xf32>
    %c1 = arith.constant 1 : index
    %c0_28 = arith.constant 0 : index
    %c0_29 = arith.constant 0 : index
    %31 = vector.load %arg9[%c1, %c0_28, %c0_29] : memref<2x2x32xf32, #tpu.memory_space<vmem>>, vector<1x2x32xf32>
    %32 = vector.shape_cast %31 : vector<1x2x32xf32> to vector<2x32xf32>
    %c1_30 = arith.constant 1 : index
    %c0_31 = arith.constant 0 : index
    %c0_32 = arith.constant 0 : index
    %33 = vector.load %arg10[%c1_30, %c0_31, %c0_32] : memref<2x2x32xf32, #tpu.memory_space<vmem>>, vector<1x2x32xf32>
    %34 = vector.shape_cast %33 : vector<1x2x32xf32> to vector<2x32xf32>
    %c0_33 = arith.constant 0 : index
    %c0_34 = arith.constant 0 : index
    %35 = vector.load %arg18[%c0_33, %c0_34] : memref<16x256xf32, #tpu.memory_space<vmem>>, vector<2x128xf32>
    %cst_35 = arith.constant dense<0.000000e+00> : vector<2x128xf32>
    %36 = tpu.matmul %28, %25, %cst_35 {dimension_numbers = #tpu.dot_dimension_numbers<[1], [0], [0], [1], [0, 0, 1, 1], [], []>} : vector<2x32xf32>, vector<32x128xf32>, vector<2x128xf32> -> vector<2x128xf32>
    %37 = arith.addf %35, %36 : vector<2x128xf32>
    %38 = arith.negf %37 : vector<2x128xf32>
    %39 = math.exp %38 : vector<2x128xf32>
    %cst_36 = arith.constant 1.000000e+00 : f32
    %40 = vector.broadcast %cst_36 : f32 to vector<2x128xf32>
    %41 = arith.addf %40, %39 : vector<2x128xf32>
    %42 = arith.divf %40, %41 : vector<2x128xf32>
    %43 = math.tanh %37 : vector<2x128xf32>
    %44 = vector.extract_strided_slice %42 {offsets = [0, 0], sizes = [2, 32], strides = [1, 1]} : vector<2x128xf32> to vector<2x32xf32>
    %45 = vector.extract_strided_slice %42 {offsets = [0, 32], sizes = [2, 32], strides = [1, 1]} : vector<2x128xf32> to vector<2x32xf32>
    %46 = vector.extract_strided_slice %43 {offsets = [0, 64], sizes = [2, 32], strides = [1, 1]} : vector<2x128xf32> to vector<2x32xf32>
    %47 = vector.extract_strided_slice %42 {offsets = [0, 96], sizes = [2, 32], strides = [1, 1]} : vector<2x128xf32> to vector<2x32xf32>
    %48 = arith.mulf %45, %30 : vector<2x32xf32>
    %49 = arith.mulf %44, %46 : vector<2x32xf32>
    %50 = arith.addf %48, %49 : vector<2x32xf32>
    %51 = math.tanh %50 : vector<2x32xf32>
    %52 = arith.mulf %47, %51 : vector<2x32xf32>
    %c0_37 = arith.constant 0 : index
    %c0_38 = arith.constant 0 : index
    %53 = vector.load %arg19[%c0_37, %c0_38] : memref<16x32xf32, #tpu.memory_space<vmem>>, vector<2x32xf32>
    tpu.vector_store %arg19[%c0_37, %c0_38], %52 {strides = array<i32>} : memref<16x32xf32, #tpu.memory_space<vmem>>, vector<2x32xf32>,
    %c14 = arith.constant 14 : index
    %c128 = arith.constant 128 : index
    %54 = vector.load %arg18[%c14, %c128] : memref<16x256xf32, #tpu.memory_space<vmem>>, vector<2x128xf32>
    %cst_39 = arith.constant dense<0.000000e+00> : vector<2x128xf32>
    %55 = tpu.matmul %32, %26, %cst_39 {dimension_numbers = #tpu.dot_dimension_numbers<[1], [0], [0], [1], [0, 0, 1, 1], [], []>} : vector<2x32xf32>, vector<32x128xf32>, vector<2x128xf32> -> vector<2x128xf32>
    %56 = arith.addf %54, %55 : vector<2x128xf32>
    %57 = arith.negf %56 : vector<2x128xf32>
    %58 = math.exp %57 : vector<2x128xf32>
    %cst_40 = arith.constant 1.000000e+00 : f32
    %59 = vector.broadcast %cst_40 : f32 to vector<2x128xf32>
    %60 = arith.addf %59, %58 : vector<2x128xf32>
    %61 = arith.divf %59, %60 : vector<2x128xf32>
    %62 = math.tanh %56 : vector<2x128xf32>
    %63 = vector.extract_strided_slice %61 {offsets = [0, 0], sizes = [2, 32], strides = [1, 1]} : vector<2x128xf32> to vector<2x32xf32>
    %64 = vector.extract_strided_slice %61 {offsets = [0, 32], sizes = [2, 32], strides = [1, 1]} : vector<2x128xf32> to vector<2x32xf32>
    %65 = vector.extract_strided_slice %62 {offsets = [0, 64], sizes = [2, 32], strides = [1, 1]} : vector<2x128xf32> to vector<2x32xf32>
    %66 = vector.extract_strided_slice %61 {offsets = [0, 96], sizes = [2, 32], strides = [1, 1]} : vector<2x128xf32> to vector<2x32xf32>
    %67 = arith.mulf %64, %34 : vector<2x32xf32>
    %68 = arith.mulf %63, %65 : vector<2x32xf32>
    %69 = arith.addf %67, %68 : vector<2x32xf32>
    %70 = math.tanh %69 : vector<2x32xf32>
    %71 = arith.mulf %66, %70 : vector<2x32xf32>
    %c14_41 = arith.constant 14 : index
    %c0_42 = arith.constant 0 : index
    %72 = vector.load %arg20[%c14_41, %c0_42] : memref<16x32xf32, #tpu.memory_space<vmem>>, vector<2x32xf32>
    tpu.vector_store %arg20[%c14_41, %c0_42], %71 {strides = array<i32>} : memref<16x32xf32, #tpu.memory_space<vmem>>, vector<2x32xf32>,
    %c2 = arith.constant 2 : index
    %c0_43 = arith.constant 0 : index
    %73 = vector.load %arg18[%c2, %c0_43] : memref<16x256xf32, #tpu.memory_space<vmem>>, vector<2x128xf32>
    %cst_44 = arith.constant dense<0.000000e+00> : vector<2x128xf32>
    %74 = tpu.matmul %52, %25, %cst_44 {dimension_numbers = #tpu.dot_dimension_numbers<[1], [0], [0], [1], [0, 0, 1, 1], [], []>} : vector<2x32xf32>, vector<32x128xf32>, vector<2x128xf32> -> vector<2x128xf32>
    %75 = arith.addf %73, %74 : vector<2x128xf32>
    %76 = arith.negf %75 : vector<2x128xf32>
    %77 = math.exp %76 : vector<2x128xf32>
    %cst_45 = arith.constant 1.000000e+00 : f32
    %78 = vector.broadcast %cst_45 : f32 to vector<2x128xf32>
    %79 = arith.addf %78, %77 : vector<2x128xf32>
    %80 = arith.divf %78, %79 : vector<2x128xf32>
    %81 = math.tanh %75 : vector<2x128xf32>
    %82 = vector.extract_strided_slice %80 {offsets = [0, 0], sizes = [2, 32], strides = [1, 1]} : vector<2x128xf32> to vector<2x32xf32>
    %83 = vector.extract_strided_slice %80 {offsets = [0, 32], sizes = [2, 32], strides = [1, 1]} : vector<2x128xf32> to vector<2x32xf32>
    %84 = vector.extract_strided_slice %81 {offsets = [0, 64], sizes = [2, 32], strides = [1, 1]} : vector<2x128xf32> to vector<2x32xf32>
    %85 = vector.extract_strided_slice %80 {offsets = [0, 96], sizes = [2, 32], strides = [1, 1]} : vector<2x128xf32> to vector<2x32xf32>
    %86 = arith.mulf %83, %50 : vector<2x32xf32>
    %87 = arith.mulf %82, %84 : vector<2x32xf32>
    %88 = arith.addf %86, %87 : vector<2x32xf32>
    %89 = math.tanh %88 : vector<2x32xf32>
    %90 = arith.mulf %85, %89 : vector<2x32xf32>
    %c2_46 = arith.constant 2 : index
    %c0_47 = arith.constant 0 : index
    %91 = vector.load %arg19[%c2_46, %c0_47] : memref<16x32xf32, #tpu.memory_space<vmem>>, vector<2x32xf32>
    tpu.vector_store %arg19[%c2_46, %c0_47], %90 {strides = array<i32>} : memref<16x32xf32, #tpu.memory_space<vmem>>, vector<2x32xf32>,
    %c12 = arith.constant 12 : index
    %c128_48 = arith.constant 128 : index
    %92 = vector.load %arg18[%c12, %c128_48] : memref<16x256xf32, #tpu.memory_space<vmem>>, vector<2x128xf32>
    %cst_49 = arith.constant dense<0.000000e+00> : vector<2x128xf32>
    %93 = tpu.matmul %71, %26, %cst_49 {dimension_numbers = #tpu.dot_dimension_numbers<[1], [0], [0], [1], [0, 0, 1, 1], [], []>} : vector<2x32xf32>, vector<32x128xf32>, vector<2x128xf32> -> vector<2x128xf32>
    %94 = arith.addf %92, %93 : vector<2x128xf32>
    %95 = arith.negf %94 : vector<2x128xf32>
    %96 = math.exp %95 : vector<2x128xf32>
    %cst_50 = arith.constant 1.000000e+00 : f32
    %97 = vector.broadcast %cst_50 : f32 to vector<2x128xf32>
    %98 = arith.addf %97, %96 : vector<2x128xf32>
    %99 = arith.divf %97, %98 : vector<2x128xf32>
    %100 = math.tanh %94 : vector<2x128xf32>
    %101 = vector.extract_strided_slice %99 {offsets = [0, 0], sizes = [2, 32], strides = [1, 1]} : vector<2x128xf32> to vector<2x32xf32>
    %102 = vector.extract_strided_slice %99 {offsets = [0, 32], sizes = [2, 32], strides = [1, 1]} : vector<2x128xf32> to vector<2x32xf32>
    %103 = vector.extract_strided_slice %100 {offsets = [0, 64], sizes = [2, 32], strides = [1, 1]} : vector<2x128xf32> to vector<2x32xf32>
    %104 = vector.extract_strided_slice %99 {offsets = [0, 96], sizes = [2, 32], strides = [1, 1]} : vector<2x128xf32> to vector<2x32xf32>
    %105 = arith.mulf %102, %69 : vector<2x32xf32>
    %106 = arith.mulf %101, %103 : vector<2x32xf32>
    %107 = arith.addf %105, %106 : vector<2x32xf32>
    %108 = math.tanh %107 : vector<2x32xf32>
    %109 = arith.mulf %104, %108 : vector<2x32xf32>
    %c12_51 = arith.constant 12 : index
    %c0_52 = arith.constant 0 : index
    %110 = vector.load %arg20[%c12_51, %c0_52] : memref<16x32xf32, #tpu.memory_space<vmem>>, vector<2x32xf32>
    tpu.vector_store %arg20[%c12_51, %c0_52], %109 {strides = array<i32>} : memref<16x32xf32, #tpu.memory_space<vmem>>, vector<2x32xf32>,
    %c4 = arith.constant 4 : index
    %c0_53 = arith.constant 0 : index
    %111 = vector.load %arg18[%c4, %c0_53] : memref<16x256xf32, #tpu.memory_space<vmem>>, vector<2x128xf32>
    %cst_54 = arith.constant dense<0.000000e+00> : vector<2x128xf32>
    %112 = tpu.matmul %90, %25, %cst_54 {dimension_numbers = #tpu.dot_dimension_numbers<[1], [0], [0], [1], [0, 0, 1, 1], [], []>} : vector<2x32xf32>, vector<32x128xf32>, vector<2x128xf32> -> vector<2x128xf32>
    %113 = arith.addf %111, %112 : vector<2x128xf32>
    %114 = arith.negf %113 : vector<2x128xf32>
    %115 = math.exp %114 : vector<2x128xf32>
    %cst_55 = arith.constant 1.000000e+00 : f32
    %116 = vector.broadcast %cst_55 : f32 to vector<2x128xf32>
    %117 = arith.addf %116, %115 : vector<2x128xf32>
    %118 = arith.divf %116, %117 : vector<2x128xf32>
    %119 = math.tanh %113 : vector<2x128xf32>
    %120 = vector.extract_strided_slice %118 {offsets = [0, 0], sizes = [2, 32], strides = [1, 1]} : vector<2x128xf32> to vector<2x32xf32>
    %121 = vector.extract_strided_slice %118 {offsets = [0, 32], sizes = [2, 32], strides = [1, 1]} : vector<2x128xf32> to vector<2x32xf32>
    %122 = vector.extract_strided_slice %119 {offsets = [0, 64], sizes = [2, 32], strides = [1, 1]} : vector<2x128xf32> to vector<2x32xf32>
    %123 = vector.extract_strided_slice %118 {offsets = [0, 96], sizes = [2, 32], strides = [1, 1]} : vector<2x128xf32> to vector<2x32xf32>
    %124 = arith.mulf %121, %88 : vector<2x32xf32>
    %125 = arith.mulf %120, %122 : vector<2x32xf32>
    %126 = arith.addf %124, %125 : vector<2x32xf32>
    %127 = math.tanh %126 : vector<2x32xf32>
    %128 = arith.mulf %123, %127 : vector<2x32xf32>
    %c4_56 = arith.constant 4 : index
    %c0_57 = arith.constant 0 : index
    %129 = vector.load %arg19[%c4_56, %c0_57] : memref<16x32xf32, #tpu.memory_space<vmem>>, vector<2x32xf32>
    tpu.vector_store %arg19[%c4_56, %c0_57], %128 {strides = array<i32>} : memref<16x32xf32, #tpu.memory_space<vmem>>, vector<2x32xf32>,
    %c10 = arith.constant 10 : index
    %c128_58 = arith.constant 128 : index
    %130 = vector.load %arg18[%c10, %c128_58] : memref<16x256xf32, #tpu.memory_space<vmem>>, vector<2x128xf32>
    %cst_59 = arith.constant dense<0.000000e+00> : vector<2x128xf32>
    %131 = tpu.matmul %109, %26, %cst_59 {dimension_numbers = #tpu.dot_dimension_numbers<[1], [0], [0], [1], [0, 0, 1, 1], [], []>} : vector<2x32xf32>, vector<32x128xf32>, vector<2x128xf32> -> vector<2x128xf32>
    %132 = arith.addf %130, %131 : vector<2x128xf32>
    %133 = arith.negf %132 : vector<2x128xf32>
    %134 = math.exp %133 : vector<2x128xf32>
    %cst_60 = arith.constant 1.000000e+00 : f32
    %135 = vector.broadcast %cst_60 : f32 to vector<2x128xf32>
    %136 = arith.addf %135, %134 : vector<2x128xf32>
    %137 = arith.divf %135, %136 : vector<2x128xf32>
    %138 = math.tanh %132 : vector<2x128xf32>
    %139 = vector.extract_strided_slice %137 {offsets = [0, 0], sizes = [2, 32], strides = [1, 1]} : vector<2x128xf32> to vector<2x32xf32>
    %140 = vector.extract_strided_slice %137 {offsets = [0, 32], sizes = [2, 32], strides = [1, 1]} : vector<2x128xf32> to vector<2x32xf32>
    %141 = vector.extract_strided_slice %138 {offsets = [0, 64], sizes = [2, 32], strides = [1, 1]} : vector<2x128xf32> to vector<2x32xf32>
    %142 = vector.extract_strided_slice %137 {offsets = [0, 96], sizes = [2, 32], strides = [1, 1]} : vector<2x128xf32> to vector<2x32xf32>
    %143 = arith.mulf %140, %107 : vector<2x32xf32>
    %144 = arith.mulf %139, %141 : vector<2x32xf32>
    %145 = arith.addf %143, %144 : vector<2x32xf32>
    %146 = math.tanh %145 : vector<2x32xf32>
    %147 = arith.mulf %142, %146 : vector<2x32xf32>
    %c10_61 = arith.constant 10 : index
    %c0_62 = arith.constant 0 : index
    %148 = vector.load %arg20[%c10_61, %c0_62] : memref<16x32xf32, #tpu.memory_space<vmem>>, vector<2x32xf32>
    tpu.vector_store %arg20[%c10_61, %c0_62], %147 {strides = array<i32>} : memref<16x32xf32, #tpu.memory_space<vmem>>, vector<2x32xf32>,
    %c6 = arith.constant 6 : index
    %c0_63 = arith.constant 0 : index
    %149 = vector.load %arg18[%c6, %c0_63] : memref<16x256xf32, #tpu.memory_space<vmem>>, vector<2x128xf32>
    %cst_64 = arith.constant dense<0.000000e+00> : vector<2x128xf32>
    %150 = tpu.matmul %128, %25, %cst_64 {dimension_numbers = #tpu.dot_dimension_numbers<[1], [0], [0], [1], [0, 0, 1, 1], [], []>} : vector<2x32xf32>, vector<32x128xf32>, vector<2x128xf32> -> vector<2x128xf32>
    %151 = arith.addf %149, %150 : vector<2x128xf32>
    %152 = arith.negf %151 : vector<2x128xf32>
    %153 = math.exp %152 : vector<2x128xf32>
    %cst_65 = arith.constant 1.000000e+00 : f32
    %154 = vector.broadcast %cst_65 : f32 to vector<2x128xf32>
    %155 = arith.addf %154, %153 : vector<2x128xf32>
    %156 = arith.divf %154, %155 : vector<2x128xf32>
    %157 = math.tanh %151 : vector<2x128xf32>
    %158 = vector.extract_strided_slice %156 {offsets = [0, 0], sizes = [2, 32], strides = [1, 1]} : vector<2x128xf32> to vector<2x32xf32>
    %159 = vector.extract_strided_slice %156 {offsets = [0, 32], sizes = [2, 32], strides = [1, 1]} : vector<2x128xf32> to vector<2x32xf32>
    %160 = vector.extract_strided_slice %157 {offsets = [0, 64], sizes = [2, 32], strides = [1, 1]} : vector<2x128xf32> to vector<2x32xf32>
    %161 = vector.extract_strided_slice %156 {offsets = [0, 96], sizes = [2, 32], strides = [1, 1]} : vector<2x128xf32> to vector<2x32xf32>
    %162 = arith.mulf %159, %126 : vector<2x32xf32>
    %163 = arith.mulf %158, %160 : vector<2x32xf32>
    %164 = arith.addf %162, %163 : vector<2x32xf32>
    %165 = math.tanh %164 : vector<2x32xf32>
    %166 = arith.mulf %161, %165 : vector<2x32xf32>
    %c6_66 = arith.constant 6 : index
    %c0_67 = arith.constant 0 : index
    %167 = vector.load %arg19[%c6_66, %c0_67] : memref<16x32xf32, #tpu.memory_space<vmem>>, vector<2x32xf32>
    tpu.vector_store %arg19[%c6_66, %c0_67], %166 {strides = array<i32>} : memref<16x32xf32, #tpu.memory_space<vmem>>, vector<2x32xf32>,
    %c8 = arith.constant 8 : index
    %c128_68 = arith.constant 128 : index
    %168 = vector.load %arg18[%c8, %c128_68] : memref<16x256xf32, #tpu.memory_space<vmem>>, vector<2x128xf32>
    %cst_69 = arith.constant dense<0.000000e+00> : vector<2x128xf32>
    %169 = tpu.matmul %147, %26, %cst_69 {dimension_numbers = #tpu.dot_dimension_numbers<[1], [0], [0], [1], [0, 0, 1, 1], [], []>} : vector<2x32xf32>, vector<32x128xf32>, vector<2x128xf32> -> vector<2x128xf32>
    %170 = arith.addf %168, %169 : vector<2x128xf32>
    %171 = arith.negf %170 : vector<2x128xf32>
    %172 = math.exp %171 : vector<2x128xf32>
    %cst_70 = arith.constant 1.000000e+00 : f32
    %173 = vector.broadcast %cst_70 : f32 to vector<2x128xf32>
    %174 = arith.addf %173, %172 : vector<2x128xf32>
    %175 = arith.divf %173, %174 : vector<2x128xf32>
    %176 = math.tanh %170 : vector<2x128xf32>
    %177 = vector.extract_strided_slice %175 {offsets = [0, 0], sizes = [2, 32], strides = [1, 1]} : vector<2x128xf32> to vector<2x32xf32>
    %178 = vector.extract_strided_slice %175 {offsets = [0, 32], sizes = [2, 32], strides = [1, 1]} : vector<2x128xf32> to vector<2x32xf32>
    %179 = vector.extract_strided_slice %176 {offsets = [0, 64], sizes = [2, 32], strides = [1, 1]} : vector<2x128xf32> to vector<2x32xf32>
    %180 = vector.extract_strided_slice %175 {offsets = [0, 96], sizes = [2, 32], strides = [1, 1]} : vector<2x128xf32> to vector<2x32xf32>
    %181 = arith.mulf %178, %145 : vector<2x32xf32>
    %182 = arith.mulf %177, %179 : vector<2x32xf32>
    %183 = arith.addf %181, %182 : vector<2x32xf32>
    %184 = math.tanh %183 : vector<2x32xf32>
    %185 = arith.mulf %180, %184 : vector<2x32xf32>
    %c8_71 = arith.constant 8 : index
    %c0_72 = arith.constant 0 : index
    %186 = vector.load %arg20[%c8_71, %c0_72] : memref<16x32xf32, #tpu.memory_space<vmem>>, vector<2x32xf32>
    tpu.vector_store %arg20[%c8_71, %c0_72], %185 {strides = array<i32>} : memref<16x32xf32, #tpu.memory_space<vmem>>, vector<2x32xf32>,
    %c8_73 = arith.constant 8 : index
    %c0_74 = arith.constant 0 : index
    %187 = vector.load %arg18[%c8_73, %c0_74] : memref<16x256xf32, #tpu.memory_space<vmem>>, vector<2x128xf32>
    %cst_75 = arith.constant dense<0.000000e+00> : vector<2x128xf32>
    %188 = tpu.matmul %166, %25, %cst_75 {dimension_numbers = #tpu.dot_dimension_numbers<[1], [0], [0], [1], [0, 0, 1, 1], [], []>} : vector<2x32xf32>, vector<32x128xf32>, vector<2x128xf32> -> vector<2x128xf32>
    %189 = arith.addf %187, %188 : vector<2x128xf32>
    %190 = arith.negf %189 : vector<2x128xf32>
    %191 = math.exp %190 : vector<2x128xf32>
    %cst_76 = arith.constant 1.000000e+00 : f32
    %192 = vector.broadcast %cst_76 : f32 to vector<2x128xf32>
    %193 = arith.addf %192, %191 : vector<2x128xf32>
    %194 = arith.divf %192, %193 : vector<2x128xf32>
    %195 = math.tanh %189 : vector<2x128xf32>
    %196 = vector.extract_strided_slice %194 {offsets = [0, 0], sizes = [2, 32], strides = [1, 1]} : vector<2x128xf32> to vector<2x32xf32>
    %197 = vector.extract_strided_slice %194 {offsets = [0, 32], sizes = [2, 32], strides = [1, 1]} : vector<2x128xf32> to vector<2x32xf32>
    %198 = vector.extract_strided_slice %195 {offsets = [0, 64], sizes = [2, 32], strides = [1, 1]} : vector<2x128xf32> to vector<2x32xf32>
    %199 = vector.extract_strided_slice %194 {offsets = [0, 96], sizes = [2, 32], strides = [1, 1]} : vector<2x128xf32> to vector<2x32xf32>
    %200 = arith.mulf %197, %164 : vector<2x32xf32>
    %201 = arith.mulf %196, %198 : vector<2x32xf32>
    %202 = arith.addf %200, %201 : vector<2x32xf32>
    %203 = math.tanh %202 : vector<2x32xf32>
    %204 = arith.mulf %199, %203 : vector<2x32xf32>
    %c8_77 = arith.constant 8 : index
    %c0_78 = arith.constant 0 : index
    %205 = vector.load %arg19[%c8_77, %c0_78] : memref<16x32xf32, #tpu.memory_space<vmem>>, vector<2x32xf32>
    tpu.vector_store %arg19[%c8_77, %c0_78], %204 {strides = array<i32>} : memref<16x32xf32, #tpu.memory_space<vmem>>, vector<2x32xf32>,
    %c6_79 = arith.constant 6 : index
    %c128_80 = arith.constant 128 : index
    %206 = vector.load %arg18[%c6_79, %c128_80] : memref<16x256xf32, #tpu.memory_space<vmem>>, vector<2x128xf32>
    %cst_81 = arith.constant dense<0.000000e+00> : vector<2x128xf32>
    %207 = tpu.matmul %185, %26, %cst_81 {dimension_numbers = #tpu.dot_dimension_numbers<[1], [0], [0], [1], [0, 0, 1, 1], [], []>} : vector<2x32xf32>, vector<32x128xf32>, vector<2x128xf32> -> vector<2x128xf32>
    %208 = arith.addf %206, %207 : vector<2x128xf32>
    %209 = arith.negf %208 : vector<2x128xf32>
    %210 = math.exp %209 : vector<2x128xf32>
    %cst_82 = arith.constant 1.000000e+00 : f32
    %211 = vector.broadcast %cst_82 : f32 to vector<2x128xf32>
    %212 = arith.addf %211, %210 : vector<2x128xf32>
    %213 = arith.divf %211, %212 : vector<2x128xf32>
    %214 = math.tanh %208 : vector<2x128xf32>
    %215 = vector.extract_strided_slice %213 {offsets = [0, 0], sizes = [2, 32], strides = [1, 1]} : vector<2x128xf32> to vector<2x32xf32>
    %216 = vector.extract_strided_slice %213 {offsets = [0, 32], sizes = [2, 32], strides = [1, 1]} : vector<2x128xf32> to vector<2x32xf32>
    %217 = vector.extract_strided_slice %214 {offsets = [0, 64], sizes = [2, 32], strides = [1, 1]} : vector<2x128xf32> to vector<2x32xf32>
    %218 = vector.extract_strided_slice %213 {offsets = [0, 96], sizes = [2, 32], strides = [1, 1]} : vector<2x128xf32> to vector<2x32xf32>
    %219 = arith.mulf %216, %183 : vector<2x32xf32>
    %220 = arith.mulf %215, %217 : vector<2x32xf32>
    %221 = arith.addf %219, %220 : vector<2x32xf32>
    %222 = math.tanh %221 : vector<2x32xf32>
    %223 = arith.mulf %218, %222 : vector<2x32xf32>
    %c6_83 = arith.constant 6 : index
    %c0_84 = arith.constant 0 : index
    %224 = vector.load %arg20[%c6_83, %c0_84] : memref<16x32xf32, #tpu.memory_space<vmem>>, vector<2x32xf32>
    tpu.vector_store %arg20[%c6_83, %c0_84], %223 {strides = array<i32>} : memref<16x32xf32, #tpu.memory_space<vmem>>, vector<2x32xf32>,
    %c10_85 = arith.constant 10 : index
    %c0_86 = arith.constant 0 : index
    %225 = vector.load %arg18[%c10_85, %c0_86] : memref<16x256xf32, #tpu.memory_space<vmem>>, vector<2x128xf32>
    %cst_87 = arith.constant dense<0.000000e+00> : vector<2x128xf32>
    %226 = tpu.matmul %204, %25, %cst_87 {dimension_numbers = #tpu.dot_dimension_numbers<[1], [0], [0], [1], [0, 0, 1, 1], [], []>} : vector<2x32xf32>, vector<32x128xf32>, vector<2x128xf32> -> vector<2x128xf32>
    %227 = arith.addf %225, %226 : vector<2x128xf32>
    %228 = arith.negf %227 : vector<2x128xf32>
    %229 = math.exp %228 : vector<2x128xf32>
    %cst_88 = arith.constant 1.000000e+00 : f32
    %230 = vector.broadcast %cst_88 : f32 to vector<2x128xf32>
    %231 = arith.addf %230, %229 : vector<2x128xf32>
    %232 = arith.divf %230, %231 : vector<2x128xf32>
    %233 = math.tanh %227 : vector<2x128xf32>
    %234 = vector.extract_strided_slice %232 {offsets = [0, 0], sizes = [2, 32], strides = [1, 1]} : vector<2x128xf32> to vector<2x32xf32>
    %235 = vector.extract_strided_slice %232 {offsets = [0, 32], sizes = [2, 32], strides = [1, 1]} : vector<2x128xf32> to vector<2x32xf32>
    %236 = vector.extract_strided_slice %233 {offsets = [0, 64], sizes = [2, 32], strides = [1, 1]} : vector<2x128xf32> to vector<2x32xf32>
    %237 = vector.extract_strided_slice %232 {offsets = [0, 96], sizes = [2, 32], strides = [1, 1]} : vector<2x128xf32> to vector<2x32xf32>
    %238 = arith.mulf %235, %202 : vector<2x32xf32>
    %239 = arith.mulf %234, %236 : vector<2x32xf32>
    %240 = arith.addf %238, %239 : vector<2x32xf32>
    %241 = math.tanh %240 : vector<2x32xf32>
    %242 = arith.mulf %237, %241 : vector<2x32xf32>
    %c10_89 = arith.constant 10 : index
    %c0_90 = arith.constant 0 : index
    %243 = vector.load %arg19[%c10_89, %c0_90] : memref<16x32xf32, #tpu.memory_space<vmem>>, vector<2x32xf32>
    tpu.vector_store %arg19[%c10_89, %c0_90], %242 {strides = array<i32>} : memref<16x32xf32, #tpu.memory_space<vmem>>, vector<2x32xf32>,
    %c4_91 = arith.constant 4 : index
    %c128_92 = arith.constant 128 : index
    %244 = vector.load %arg18[%c4_91, %c128_92] : memref<16x256xf32, #tpu.memory_space<vmem>>, vector<2x128xf32>
    %cst_93 = arith.constant dense<0.000000e+00> : vector<2x128xf32>
    %245 = tpu.matmul %223, %26, %cst_93 {dimension_numbers = #tpu.dot_dimension_numbers<[1], [0], [0], [1], [0, 0, 1, 1], [], []>} : vector<2x32xf32>, vector<32x128xf32>, vector<2x128xf32> -> vector<2x128xf32>
    %246 = arith.addf %244, %245 : vector<2x128xf32>
    %247 = arith.negf %246 : vector<2x128xf32>
    %248 = math.exp %247 : vector<2x128xf32>
    %cst_94 = arith.constant 1.000000e+00 : f32
    %249 = vector.broadcast %cst_94 : f32 to vector<2x128xf32>
    %250 = arith.addf %249, %248 : vector<2x128xf32>
    %251 = arith.divf %249, %250 : vector<2x128xf32>
    %252 = math.tanh %246 : vector<2x128xf32>
    %253 = vector.extract_strided_slice %251 {offsets = [0, 0], sizes = [2, 32], strides = [1, 1]} : vector<2x128xf32> to vector<2x32xf32>
    %254 = vector.extract_strided_slice %251 {offsets = [0, 32], sizes = [2, 32], strides = [1, 1]} : vector<2x128xf32> to vector<2x32xf32>
    %255 = vector.extract_strided_slice %252 {offsets = [0, 64], sizes = [2, 32], strides = [1, 1]} : vector<2x128xf32> to vector<2x32xf32>
    %256 = vector.extract_strided_slice %251 {offsets = [0, 96], sizes = [2, 32], strides = [1, 1]} : vector<2x128xf32> to vector<2x32xf32>
    %257 = arith.mulf %254, %221 : vector<2x32xf32>
    %258 = arith.mulf %253, %255 : vector<2x32xf32>
    %259 = arith.addf %257, %258 : vector<2x32xf32>
    %260 = math.tanh %259 : vector<2x32xf32>
    %261 = arith.mulf %256, %260 : vector<2x32xf32>
    %c4_95 = arith.constant 4 : index
    %c0_96 = arith.constant 0 : index
    %262 = vector.load %arg20[%c4_95, %c0_96] : memref<16x32xf32, #tpu.memory_space<vmem>>, vector<2x32xf32>
    tpu.vector_store %arg20[%c4_95, %c0_96], %261 {strides = array<i32>} : memref<16x32xf32, #tpu.memory_space<vmem>>, vector<2x32xf32>,
    %c12_97 = arith.constant 12 : index
    %c0_98 = arith.constant 0 : index
    %263 = vector.load %arg18[%c12_97, %c0_98] : memref<16x256xf32, #tpu.memory_space<vmem>>, vector<2x128xf32>
    %cst_99 = arith.constant dense<0.000000e+00> : vector<2x128xf32>
    %264 = tpu.matmul %242, %25, %cst_99 {dimension_numbers = #tpu.dot_dimension_numbers<[1], [0], [0], [1], [0, 0, 1, 1], [], []>} : vector<2x32xf32>, vector<32x128xf32>, vector<2x128xf32> -> vector<2x128xf32>
    %265 = arith.addf %263, %264 : vector<2x128xf32>
    %266 = arith.negf %265 : vector<2x128xf32>
    %267 = math.exp %266 : vector<2x128xf32>
    %cst_100 = arith.constant 1.000000e+00 : f32
    %268 = vector.broadcast %cst_100 : f32 to vector<2x128xf32>
    %269 = arith.addf %268, %267 : vector<2x128xf32>
    %270 = arith.divf %268, %269 : vector<2x128xf32>
    %271 = math.tanh %265 : vector<2x128xf32>
    %272 = vector.extract_strided_slice %270 {offsets = [0, 0], sizes = [2, 32], strides = [1, 1]} : vector<2x128xf32> to vector<2x32xf32>
    %273 = vector.extract_strided_slice %270 {offsets = [0, 32], sizes = [2, 32], strides = [1, 1]} : vector<2x128xf32> to vector<2x32xf32>
    %274 = vector.extract_strided_slice %271 {offsets = [0, 64], sizes = [2, 32], strides = [1, 1]} : vector<2x128xf32> to vector<2x32xf32>
    %275 = vector.extract_strided_slice %270 {offsets = [0, 96], sizes = [2, 32], strides = [1, 1]} : vector<2x128xf32> to vector<2x32xf32>
    %276 = arith.mulf %273, %240 : vector<2x32xf32>
    %277 = arith.mulf %272, %274 : vector<2x32xf32>
    %278 = arith.addf %276, %277 : vector<2x32xf32>
    %279 = math.tanh %278 : vector<2x32xf32>
    %280 = arith.mulf %275, %279 : vector<2x32xf32>
    %c12_101 = arith.constant 12 : index
    %c0_102 = arith.constant 0 : index
    %281 = vector.load %arg19[%c12_101, %c0_102] : memref<16x32xf32, #tpu.memory_space<vmem>>, vector<2x32xf32>
    tpu.vector_store %arg19[%c12_101, %c0_102], %280 {strides = array<i32>} : memref<16x32xf32, #tpu.memory_space<vmem>>, vector<2x32xf32>,
    %c2_103 = arith.constant 2 : index
    %c128_104 = arith.constant 128 : index
    %282 = vector.load %arg18[%c2_103, %c128_104] : memref<16x256xf32, #tpu.memory_space<vmem>>, vector<2x128xf32>
    %cst_105 = arith.constant dense<0.000000e+00> : vector<2x128xf32>
    %283 = tpu.matmul %261, %26, %cst_105 {dimension_numbers = #tpu.dot_dimension_numbers<[1], [0], [0], [1], [0, 0, 1, 1], [], []>} : vector<2x32xf32>, vector<32x128xf32>, vector<2x128xf32> -> vector<2x128xf32>
    %284 = arith.addf %282, %283 : vector<2x128xf32>
    %285 = arith.negf %284 : vector<2x128xf32>
    %286 = math.exp %285 : vector<2x128xf32>
    %cst_106 = arith.constant 1.000000e+00 : f32
    %287 = vector.broadcast %cst_106 : f32 to vector<2x128xf32>
    %288 = arith.addf %287, %286 : vector<2x128xf32>
    %289 = arith.divf %287, %288 : vector<2x128xf32>
    %290 = math.tanh %284 : vector<2x128xf32>
    %291 = vector.extract_strided_slice %289 {offsets = [0, 0], sizes = [2, 32], strides = [1, 1]} : vector<2x128xf32> to vector<2x32xf32>
    %292 = vector.extract_strided_slice %289 {offsets = [0, 32], sizes = [2, 32], strides = [1, 1]} : vector<2x128xf32> to vector<2x32xf32>
    %293 = vector.extract_strided_slice %290 {offsets = [0, 64], sizes = [2, 32], strides = [1, 1]} : vector<2x128xf32> to vector<2x32xf32>
    %294 = vector.extract_strided_slice %289 {offsets = [0, 96], sizes = [2, 32], strides = [1, 1]} : vector<2x128xf32> to vector<2x32xf32>
    %295 = arith.mulf %292, %259 : vector<2x32xf32>
    %296 = arith.mulf %291, %293 : vector<2x32xf32>
    %297 = arith.addf %295, %296 : vector<2x32xf32>
    %298 = math.tanh %297 : vector<2x32xf32>
    %299 = arith.mulf %294, %298 : vector<2x32xf32>
    %c2_107 = arith.constant 2 : index
    %c0_108 = arith.constant 0 : index
    %300 = vector.load %arg20[%c2_107, %c0_108] : memref<16x32xf32, #tpu.memory_space<vmem>>, vector<2x32xf32>
    tpu.vector_store %arg20[%c2_107, %c0_108], %299 {strides = array<i32>} : memref<16x32xf32, #tpu.memory_space<vmem>>, vector<2x32xf32>,
    %c14_109 = arith.constant 14 : index
    %c0_110 = arith.constant 0 : index
    %301 = vector.load %arg18[%c14_109, %c0_110] : memref<16x256xf32, #tpu.memory_space<vmem>>, vector<2x128xf32>
    %cst_111 = arith.constant dense<0.000000e+00> : vector<2x128xf32>
    %302 = tpu.matmul %280, %25, %cst_111 {dimension_numbers = #tpu.dot_dimension_numbers<[1], [0], [0], [1], [0, 0, 1, 1], [], []>} : vector<2x32xf32>, vector<32x128xf32>, vector<2x128xf32> -> vector<2x128xf32>
    %303 = arith.addf %301, %302 : vector<2x128xf32>
    %304 = arith.negf %303 : vector<2x128xf32>
    %305 = math.exp %304 : vector<2x128xf32>
    %cst_112 = arith.constant 1.000000e+00 : f32
    %306 = vector.broadcast %cst_112 : f32 to vector<2x128xf32>
    %307 = arith.addf %306, %305 : vector<2x128xf32>
    %308 = arith.divf %306, %307 : vector<2x128xf32>
    %309 = math.tanh %303 : vector<2x128xf32>
    %310 = vector.extract_strided_slice %308 {offsets = [0, 0], sizes = [2, 32], strides = [1, 1]} : vector<2x128xf32> to vector<2x32xf32>
    %311 = vector.extract_strided_slice %308 {offsets = [0, 32], sizes = [2, 32], strides = [1, 1]} : vector<2x128xf32> to vector<2x32xf32>
    %312 = vector.extract_strided_slice %309 {offsets = [0, 64], sizes = [2, 32], strides = [1, 1]} : vector<2x128xf32> to vector<2x32xf32>
    %313 = vector.extract_strided_slice %308 {offsets = [0, 96], sizes = [2, 32], strides = [1, 1]} : vector<2x128xf32> to vector<2x32xf32>
    %314 = arith.mulf %311, %278 : vector<2x32xf32>
    %315 = arith.mulf %310, %312 : vector<2x32xf32>
    %316 = arith.addf %314, %315 : vector<2x32xf32>
    %317 = math.tanh %316 : vector<2x32xf32>
    %318 = arith.mulf %313, %317 : vector<2x32xf32>
    %c14_113 = arith.constant 14 : index
    %c0_114 = arith.constant 0 : index
    %319 = vector.load %arg19[%c14_113, %c0_114] : memref<16x32xf32, #tpu.memory_space<vmem>>, vector<2x32xf32>
    tpu.vector_store %arg19[%c14_113, %c0_114], %318 {strides = array<i32>} : memref<16x32xf32, #tpu.memory_space<vmem>>, vector<2x32xf32>,
    %c0_115 = arith.constant 0 : index
    %c128_116 = arith.constant 128 : index
    %320 = vector.load %arg18[%c0_115, %c128_116] : memref<16x256xf32, #tpu.memory_space<vmem>>, vector<2x128xf32>
    %cst_117 = arith.constant dense<0.000000e+00> : vector<2x128xf32>
    %321 = tpu.matmul %299, %26, %cst_117 {dimension_numbers = #tpu.dot_dimension_numbers<[1], [0], [0], [1], [0, 0, 1, 1], [], []>} : vector<2x32xf32>, vector<32x128xf32>, vector<2x128xf32> -> vector<2x128xf32>
    %322 = arith.addf %320, %321 : vector<2x128xf32>
    %323 = arith.negf %322 : vector<2x128xf32>
    %324 = math.exp %323 : vector<2x128xf32>
    %cst_118 = arith.constant 1.000000e+00 : f32
    %325 = vector.broadcast %cst_118 : f32 to vector<2x128xf32>
    %326 = arith.addf %325, %324 : vector<2x128xf32>
    %327 = arith.divf %325, %326 : vector<2x128xf32>
    %328 = math.tanh %322 : vector<2x128xf32>
    %329 = vector.extract_strided_slice %327 {offsets = [0, 0], sizes = [2, 32], strides = [1, 1]} : vector<2x128xf32> to vector<2x32xf32>
    %330 = vector.extract_strided_slice %327 {offsets = [0, 32], sizes = [2, 32], strides = [1, 1]} : vector<2x128xf32> to vector<2x32xf32>
    %331 = vector.extract_strided_slice %328 {offsets = [0, 64], sizes = [2, 32], strides = [1, 1]} : vector<2x128xf32> to vector<2x32xf32>
    %332 = vector.extract_strided_slice %327 {offsets = [0, 96], sizes = [2, 32], strides = [1, 1]} : vector<2x128xf32> to vector<2x32xf32>
    %333 = arith.mulf %330, %297 : vector<2x32xf32>
    %334 = arith.mulf %329, %331 : vector<2x32xf32>
    %335 = arith.addf %333, %334 : vector<2x32xf32>
    %336 = math.tanh %335 : vector<2x32xf32>
    %337 = arith.mulf %332, %336 : vector<2x32xf32>
    %c0_119 = arith.constant 0 : index
    %c0_120 = arith.constant 0 : index
    %338 = vector.load %arg20[%c0_119, %c0_120] : memref<16x32xf32, #tpu.memory_space<vmem>>, vector<2x32xf32>
    tpu.vector_store %arg20[%c0_119, %c0_120], %337 {strides = array<i32>} : memref<16x32xf32, #tpu.memory_space<vmem>>, vector<2x32xf32>,
    %c0_121 = arith.constant 0 : index
    %c0_122 = arith.constant 0 : index
    %339 = vector.load %arg19[%c0_121, %c0_122] : memref<16x32xf32, #tpu.memory_space<vmem>>, vector<16x32xf32>
    %c0_123 = arith.constant 0 : index
    %c0_124 = arith.constant 0 : index
    %340 = vector.load %arg11[%c0_123, %c0_124] : memref<32x300xf32, #tpu.memory_space<vmem>>, vector<32x300xf32>
    %cst_125 = arith.constant dense<0.000000e+00> : vector<16x300xf32>
    %341 = tpu.matmul %339, %340, %cst_125 {dimension_numbers = #tpu.dot_dimension_numbers<[1], [0], [0], [1], [0, 0, 1, 1], [], []>} : vector<16x32xf32>, vector<32x300xf32>, vector<16x300xf32> -> vector<16x300xf32>
    %c0_126 = arith.constant 0 : index
    %c0_127 = arith.constant 0 : index
    %342 = vector.load %arg20[%c0_126, %c0_127] : memref<16x32xf32, #tpu.memory_space<vmem>>, vector<16x32xf32>
    %c0_128 = arith.constant 0 : index
    %c0_129 = arith.constant 0 : index
    %343 = vector.load %arg12[%c0_128, %c0_129] : memref<32x300xf32, #tpu.memory_space<vmem>>, vector<32x300xf32>
    %cst_130 = arith.constant dense<0.000000e+00> : vector<16x300xf32>
    %344 = tpu.matmul %342, %343, %cst_130 {dimension_numbers = #tpu.dot_dimension_numbers<[1], [0], [0], [1], [0, 0, 1, 1], [], []>} : vector<16x32xf32>, vector<32x300xf32>, vector<16x300xf32> -> vector<16x300xf32>
    %345 = arith.addf %341, %344 : vector<16x300xf32>
    %c0_131 = arith.constant 0 : index
    %c0_132 = arith.constant 0 : index
    %346 = vector.load %arg13[%c0_131, %c0_132] : memref<1x300xf32, #tpu.memory_space<vmem>>, vector<1x300xf32>
    %347 = vector.broadcast %346 : vector<1x300xf32> to vector<16x300xf32>
    %348 = arith.addf %345, %347 : vector<16x300xf32>
    %cst_133 = arith.constant 0.000000e+00 : f32
    %349 = vector.broadcast %cst_133 : f32 to vector<16x300xf32>
    %350 = arith.maximumf %348, %349 : vector<16x300xf32>
    %c0_134 = arith.constant 0 : index
    %c0_135 = arith.constant 0 : index
    %351 = vector.load %arg14[%c0_134, %c0_135] : memref<300x128xf32, #tpu.memory_space<vmem>>, vector<300x128xf32>
    %cst_136 = arith.constant dense<0.000000e+00> : vector<16x128xf32>
    %352 = tpu.matmul %350, %351, %cst_136 {dimension_numbers = #tpu.dot_dimension_numbers<[1], [0], [0], [1], [0, 0, 1, 1], [], []>} : vector<16x300xf32>, vector<300x128xf32>, vector<16x128xf32> -> vector<16x128xf32>
    %c0_137 = arith.constant 0 : index
    %c0_138 = arith.constant 0 : index
    %353 = vector.load %arg15[%c0_137, %c0_138] : memref<1x128xf32, #tpu.memory_space<vmem>>, vector<1x128xf32>
    %354 = vector.broadcast %353 : vector<1x128xf32> to vector<16x128xf32>
    %355 = arith.addf %352, %354 : vector<16x128xf32>
    %c0_139 = arith.constant 0 : index
    %c0_140 = arith.constant 0 : index
    %356 = vector.load %arg16[%c0_139, %c0_140] : memref<16x16xf32, #tpu.memory_space<vmem>>, vector<16x16xf32>
    %cst_141 = arith.constant dense<0.000000e+00> : vector<16x128xf32>
    %357 = tpu.matmul %356, %355, %cst_141 {dimension_numbers = #tpu.dot_dimension_numbers<[1], [0], [0], [1], [0, 0, 1, 1], [], []>} : vector<16x16xf32>, vector<16x128xf32>, vector<16x128xf32> -> vector<16x128xf32>
    %358 = vector.extract_strided_slice %357 {offsets = [0, 0], sizes = [16, 3], strides = [1, 1]} : vector<16x128xf32> to vector<16x3xf32>
    %c0_142 = arith.constant 0 : index
    %c0_143 = arith.constant 0 : index
    %359 = vector.load %arg17[%c0_142, %c0_143] : memref<16x3xf32, #tpu.memory_space<vmem>>, vector<16x3xf32>
    tpu.vector_store %arg17[%c0_142, %c0_143], %358 {strides = array<i32>} : memref<16x3xf32, #tpu.memory_space<vmem>>, vector<16x3xf32>,
    return
  }
}

</mosaic_0001>

<llo_original>
// kernel: en_labeler_forward.1
$region0: #{en_labeler_forward.1}
  #allocation0 [shape = 'u32[]', space=smem, size = 0x4, offset = 0x4, fixed_abs, tag = 'smem constant byte address 0x4 - core index']
  #allocation1 [shape = 'u32[72,128]{1,0:T(1,128)}', space=vmem, size = 0x9000, scoped, tag = 'internal scratch']
  #allocation2 [shape = 'f32[16,256]{1,0:T(8,128)}', space=vmem, size = 0x4000, scoped, tag = 'scratch operand']
  #allocation3 [shape = 'f32[16,32]{1,0:T(8,128)}', space=vmem, size = 0x2000, scoped, tag = 'scratch operand']
  #allocation4 [shape = 'f32[16,32]{1,0:T(8,128)}', space=vmem, size = 0x2000, scoped, tag = 'scratch operand']
  %s0 = inlined_call_operand.vmem [shape: s32[16,1], index: 0, kind: input, shape index: {}]
  %s1 = inlined_call_operand.vmem [shape: s32[16,1], index: 1, kind: input, shape index: {}]
  %s2 = inlined_call_operand.vmem [shape: f32[60,300], index: 2, kind: input, shape index: {}]
  %s3 = inlined_call_operand.hbm [shape: f32[50,300], index: 3, kind: input, shape index: {}]
  %s4 = inlined_call_operand.vmem [shape: f32[300,256], index: 4, kind: input, shape index: {}]
  %s5 = inlined_call_operand.hbm [shape: f32[300,256], index: 5, kind: input, shape index: {}]
  %s6 = inlined_call_operand.vmem [shape: f32[32,128], index: 6, kind: input, shape index: {}]
  %s7 = inlined_call_operand.vmem [shape: f32[32,128], index: 7, kind: input, shape index: {}]
  %s8 = inlined_call_operand.vmem [shape: f32[1,256], index: 8, kind: input, shape index: {}]
  %s9 = inlined_call_operand.vmem [shape: f32[2,2,32], index: 9, kind: input, shape index: {}]
  %s10 = inlined_call_operand.vmem [shape: f32[2,2,32], index: 10, kind: input, shape index: {}]
  %s11 = inlined_call_operand.vmem [shape: f32[32,300], index: 11, kind: input, shape index: {}]
  %s12 = inlined_call_operand.hbm [shape: f32[32,300], index: 12, kind: input, shape index: {}]
  %s13 = inlined_call_operand.vmem [shape: f32[1,300], index: 13, kind: input, shape index: {}]
  %s14 = inlined_call_operand.vmem [shape: f32[300,128], index: 14, kind: input, shape index: {}]
  %s15 = inlined_call_operand.vmem [shape: f32[1,128], index: 15, kind: input, shape index: {}]
  %s16 = inlined_call_operand.vmem [shape: f32[16,16], index: 16, kind: input, shape index: {}]
  %s17 = inlined_call_operand.vmem [shape: f32[16,3], index: 17, kind: output, shape index: {}]
  %s18 = sld [smem:[#allocation0]]
  $region90: #{en_labeler_forward.1} parent=0
    _
  %s20 = ssub.s32 1, %s18
  %s21 = scalar_select 0, %s20, %s18
  $region1: #{en_labeler_forward.1} parent=0
    #allocation5 [shape = 'u8[86016]{0}', space=vmem, size = 0x15000, scoped, tag = 'input window, operand 3, single buffered']
    #allocation6 [shape = 's32[1]{0}', space=sflag, size = 0x4, scoped, tag = 'scoped memory for en_labeler_forward.1']
    #allocation7 [shape = 'u8[311296]{0}', space=vmem, size = 0x4c000, scoped, tag = 'input window, operand 5, single buffered']
    #allocation8 [shape = 's32[1]{0}', space=sflag, size = 0x4, scoped, tag = 'scoped memory for en_labeler_forward.1']
    #allocation9 [shape = 'u8[49152]{0}', space=vmem, size = 0xc000, scoped, tag = 'input window, operand 12, single buffered']
    %22 = vsyncpa [#allocation6], 0
    %23 = vsyncpa [#allocation8], 0
    // Predicated region
    $region2: #{en_labeler_forward.1} parent=1 // pred_check
      _
    $region3: #{en_labeler_forward.1} parent=1 // pred_check_branch
      %25 = sbr.rel (0) target = $region5
    $region4: #{en_labeler_forward.1} parent=1 // pred_region
      _
    $region5: #{en_labeler_forward.1} parent=1 // pred_fallthru
      _
    // Predicated region
    $region6: #{en_labeler_forward.1} parent=1 // pred_check
      _
    $region7: #{en_labeler_forward.1} parent=1 // pred_check_branch
      %27 = sbr.rel (0) target = $region9
    $region8: #{en_labeler_forward.1} parent=1 // pred_region
      _
    $region9: #{en_labeler_forward.1} parent=1 // pred_fallthru
      _
    // Predicated region
    $region10: #{en_labeler_forward.1} parent=1 // pred_check
      _
    $region11: #{en_labeler_forward.1} parent=1 // pred_check_branch
      %29 = sbr.rel (0) target = $region13
    $region12: #{en_labeler_forward.1} parent=1 // pred_region
      _
    $region13: #{en_labeler_forward.1} parent=1 // pred_fallthru
      _
    // Predicated region
    $region14: #{en_labeler_forward.1} parent=1 // pred_check
      _
    $region15: #{en_labeler_forward.1} parent=1 // pred_check_branch
      %31 = sbr.rel (0) target = $region17
    $region16: #{en_labeler_forward.1} parent=1 // pred_region
      %33 = vsyncadd [#allocation6], 0
      %s34 = sshll.u32 %s3, 4
      %s35 = int_to_ptr.hbm [resolvable:$true] %s34
      %s36 = sshll.u32 [#allocation5], 4
      %s37 = int_to_ptr.vmem [resolvable:$true] %s36
      %42 = dma.hbm_to_vmem [thread:$0]  %s35, 2688, %s37, [#allocation6], 384, 384, 24
    $region17: #{en_labeler_forward.1} parent=1 // pred_fallthru
      _
    // Predicated region
    $region18: #{en_labeler_forward.1} parent=1 // pred_check
      _
    $region19: #{en_labeler_forward.1} parent=1 // pred_check_branch
      %44 = sbr.rel (0) target = $region21
    $region20: #{en_labeler_forward.1} parent=1 // pred_region
      _
    $region21: #{en_labeler_forward.1} parent=1 // pred_fallthru
      _
    // Predicated region
    $region22: #{en_labeler_forward.1} parent=1 // pred_check
      _
    $region23: #{en_labeler_forward.1} parent=1 // pred_check_branch
      %46 = sbr.rel (0) target = $region25
    $region24: #{en_labeler_forward.1} parent=1 // pred_region
      %48 = vsyncadd [#allocation8], 0
      %s49 = sshll.u32 %s5, 4
      %s50 = int_to_ptr.hbm [resolvable:$true] %s49
      %s51 = sshll.u32 [#allocation7], 4
      %s52 = int_to_ptr.vmem [resolvable:$true] %s51
      %57 = dma.hbm_to_vmem [thread:$0]  %s50, 9728, %s52, [#allocation8], 256, 256, 16
    $region25: #{en_labeler_forward.1} parent=1 // pred_fallthru
      _
    // Predicated region
    $region26: #{en_labeler_forward.1} parent=1 // pred_check
      _
    $region27: #{en_labeler_forward.1} parent=1 // pred_check_branch
      %59 = sbr.rel (0) target = $region29
    $region28: #{en_labeler_forward.1} parent=1 // pred_region
      _
    $region29: #{en_labeler_forward.1} parent=1 // pred_fallthru
      _
    // Predicated region
    $region30: #{en_labeler_forward.1} parent=1 // pred_check
      _
    $region31: #{en_labeler_forward.1} parent=1 // pred_check_branch
      %61 = sbr.rel (0) target = $region33
    $region32: #{en_labeler_forward.1} parent=1 // pred_region
      _
    $region33: #{en_labeler_forward.1} parent=1 // pred_fallthru
      _
    // Predicated region
    $region34: #{en_labeler_forward.1} parent=1 // pred_check
      _
    $region35: #{en_labeler_forward.1} parent=1 // pred_check_branch
      %63 = sbr.rel (0) target = $region37
    $region36: #{en_labeler_forward.1} parent=1 // pred_region
      _
    $region37: #{en_labeler_forward.1} parent=1 // pred_fallthru
      _
    // Predicated region
    $region38: #{en_labeler_forward.1} parent=1 // pred_check
      _
    $region39: #{en_labeler_forward.1} parent=1 // pred_check_branch
      %65 = sbr.rel (0) target = $region41
    $region40: #{en_labeler_forward.1} parent=1 // pred_region
      _
    $region41: #{en_labeler_forward.1} parent=1 // pred_fallthru
      _
    // Predicated region
    $region42: #{en_labeler_forward.1} parent=1 // pred_check
      _
    $region43: #{en_labeler_forward.1} parent=1 // pred_check_branch
      %67 = sbr.rel (0) target = $region45
    $region44: #{en_labeler_forward.1} parent=1 // pred_region
      _
    $region45: #{en_labeler_forward.1} parent=1 // pred_fallthru
      _
    // Predicated region
    $region46: #{en_labeler_forward.1} parent=1 // pred_check
      _
    $region47: #{en_labeler_forward.1} parent=1 // pred_check_branch
      %69 = sbr.rel (0) target = $region49
    $region48: #{en_labeler_forward.1} parent=1 // pred_region
      _
    $region49: #{en_labeler_forward.1} parent=1 // pred_fallthru
      _
    // Predicated region
    $region50: #{en_labeler_forward.1} parent=1 // pred_check
      _
    $region51: #{en_labeler_forward.1} parent=1 // pred_check_branch
      %71 = sbr.rel (0) target = $region53
    $region52: #{en_labeler_forward.1} parent=1 // pred_region
      %73 = vsyncadd [#allocation8], 0
      %s74 = sshll.u32 %s12, 4
      %s75 = int_to_ptr.hbm [resolvable:$true] %s74
      %s76 = sshll.u32 [#allocation9], 4
      %s77 = int_to_ptr.vmem [resolvable:$true] %s76
      %82 = dma.hbm_to_vmem [thread:$0]  %s75, 1536, %s77, [#allocation8], 384, 384, 24
    $region53: #{en_labeler_forward.1} parent=1 // pred_fallthru
      _
    // Predicated region
    $region54: #{en_labeler_forward.1} parent=1 // pred_check
      _
    $region55: #{en_labeler_forward.1} parent=1 // pred_check_branch
      %84 = sbr.rel (0) target = $region57
    $region56: #{en_labeler_forward.1} parent=1 // pred_region
      _
    $region57: #{en_labeler_forward.1} parent=1 // pred_fallthru
      _
    // Predicated region
    $region58: #{en_labeler_forward.1} parent=1 // pred_check
      _
    $region59: #{en_labeler_forward.1} parent=1 // pred_check_branch
      %86 = sbr.rel (0) target = $region61
    $region60: #{en_labeler_forward.1} parent=1 // pred_region
      _
    $region61: #{en_labeler_forward.1} parent=1 // pred_fallthru
      _
    // Predicated region
    $region62: #{en_labeler_forward.1} parent=1 // pred_check
      _
    $region63: #{en_labeler_forward.1} parent=1 // pred_check_branch
      %88 = sbr.rel (0) target = $region65
    $region64: #{en_labeler_forward.1} parent=1 // pred_region
      _
    $region65: #{en_labeler_forward.1} parent=1 // pred_fallthru
      _
    // Predicated region
    $region66: #{en_labeler_forward.1} parent=1 // pred_check
      _
    $region67: #{en_labeler_forward.1} parent=1 // pred_check_branch
      %90 = sbr.rel (0) target = $region69
    $region68: #{en_labeler_forward.1} parent=1 // pred_region
      _
    $region69: #{en_labeler_forward.1} parent=1 // pred_fallthru
      _
    // Predicated region
    $region70: #{en_labeler_forward.1} parent=1 // pred_check
      _
    $region71: #{en_labeler_forward.1} parent=1 // pred_check_branch
      %92 = sbr.rel (0) target = $region73
    $region72: #{en_labeler_forward.1} parent=1 // pred_region
      %94 = dma.done [#allocation6], 2688
    $region73: #{en_labeler_forward.1} parent=1 // pred_fallthru
      _
    // Predicated region
    $region74: #{en_labeler_forward.1} parent=1 // pred_check
      _
    $region75: #{en_labeler_forward.1} parent=1 // pred_check_branch
      %96 = sbr.rel (0) target = $region77
    $region76: #{en_labeler_forward.1} parent=1 // pred_region
      %98 = dma.done [#allocation8], 9728
    $region77: #{en_labeler_forward.1} parent=1 // pred_fallthru
      _
    // Predicated region
    $region78: #{en_labeler_forward.1} parent=1 // pred_check
      _
    $region79: #{en_labeler_forward.1} parent=1 // pred_check_branch
      %100 = sbr.rel (0) target = $region81
    $region80: #{en_labeler_forward.1} parent=1 // pred_region
      %102 = dma.done [#allocation8], 1536
    $region81: #{en_labeler_forward.1} parent=1 // pred_fallthru
      _
    %v103 = vlaneseq
    %v104 = vand.u32 %v103, 127
    %v105 = vld [vmem:[%s0] sm:$0xff]
    %v106 = vld [vmem:[%s0 + $0x8] sm:$0xff]
    %107 = vset.pattern.permute.xlu0 0
    %108 = vperm.xlu0 %107, %v105
    %v109 = vpop.permute.xlu0 %108
    %110 = vset.pattern.permute.xlu0 0
    %111 = vperm.xlu0 %110, %v106
    %v112 = vpop.permute.xlu0 %111
    %vm113 = vcmp.eq.s32.totalorder %v104, %v109
    %vm114 = vcmp.eq.s32.totalorder %v104, %v112
    %v115 = vsel %vm113, 1, 0
    %v116 = vsel %vm114, 1, 0
    %v117 = vcvt.s32.f32 %v115
    %v118 = vcvt.s32.f32 %v116
    %v119 = vld [vmem:[%s1] sm:$0xff]
    %v120 = vld [vmem:[%s1 + $0x8] sm:$0xff]
    %121 = vset.pattern.permute.xlu0 0
    %122 = vperm.xlu0 %121, %v119
    %v123 = vpop.permute.xlu0 %122
    %124 = vset.pattern.permute.xlu0 0
    %125 = vperm.xlu0 %124, %v120
    %v126 = vpop.permute.xlu0 %125
    %vm127 = vcmp.eq.s32.totalorder %v104, %v123
    %vm128 = vcmp.eq.s32.totalorder %v104, %v126
    %v129 = vsel %vm127, 1, 0
    %v130 = vsel %vm128, 1, 0
    %v131 = vcvt.s32.f32 %v129
    %v132 = vcvt.s32.f32 %v130
    %v133 = vld [vmem:[%s2] sm:$0xff]
    %v134 = vld [vmem:[%s2 + $0x8] sm:$0xff]
    %v135 = vld [vmem:[%s2 + $0x10] sm:$0xff]
    %v136 = vld [vmem:[%s2 + $0x18] sm:$0xff]
    %v137 = vld [vmem:[%s2 + $0x20] sm:$0xff]
    %v138 = vld [vmem:[%s2 + $0x28] sm:$0xff]
    %v139 = vld [vmem:[%s2 + $0x30] sm:$0xff]
    %v140 = vld [vmem:[%s2 + $0x38] sm:$0xff]
    %v141 = vld [vmem:[%s2 + $0x40] sm:$0xff]
    %v142 = vld [vmem:[%s2 + $0x48] sm:$0xff]
    %v143 = vld [vmem:[%s2 + $0x50] sm:$0xff]
    %v144 = vld [vmem:[%s2 + $0x58] sm:$0xff]
    %v145 = vld [vmem:[%s2 + $0x60] sm:$0xff]
    %v146 = vld [vmem:[%s2 + $0x68] sm:$0xff]
    %v147 = vld [vmem:[%s2 + $0x70] sm:$0xff]
    %v148 = vld [vmem:[%s2 + $0x78] sm:$0xff]
    %v149 = vld [vmem:[%s2 + $0x80] sm:$0xff]
    %v150 = vld [vmem:[%s2 + $0x88] sm:$0xff]
    %v151 = vld [vmem:[%s2 + $0x90] sm:$0xff]
    %v152 = vld [vmem:[%s2 + $0x98] sm:$0xff]
    %v153 = vld [vmem:[%s2 + $0xa0] sm:$0xff]
    %v154 = vld [vmem:[%s2 + $0xa8] sm:$0xf]
    %v155 = vld [vmem:[%s2 + $0xb0] sm:$0xf]
    %v156 = vld [vmem:[%s2 + $0xb8] sm:$0xf]
    %vm157 = vcmask 490496
    %v159 = vsel %vm157, %v117, 0
    %v162 = vsel %vm157, %v118, 0
    %vm164 = vcmask 1043456
    %v166 = vsel %vm164, %v154, 0
    %v169 = vsel %vm164, %v155, 0
    %v172 = vsel %vm164, %v156, 0
    %174 = vmatpush.msra.mxu0 0.0
    %175 = vmatpush.msra.mxu0 0.0
    %176 = vmatpush.msra.mxu0 0.0
    %177 = vmatpush.msra.mxu0 0.0
    %178 = vmatpush.msra.mxu0 0.0
    %179 = vmatpush.msra.mxu0 0.0
    %180 = vmatpush.msra.mxu0 0.0
    %181 = vmatpush.msra.mxu0 0.0
    %182 = vmatpush.msra.mxu0 %v166
    %183 = vmatpush.msra.mxu0 %v151
    %184 = vmatpush.msra.mxu0 %v148
    %185 = vmatpush.msra.mxu0 %v145
    %186 = vmatpush.msra.mxu0 %v142
    %187 = vmatpush.msra.mxu0 %v139
    %188 = vmatpush.msra.mxu0 %v136
    %189 = vmatpush.msra.mxu0 %v133
    %190 = vmatmul.f32.gmra.mxu0 %v159
    %v191 = vpop.f32.mrf.mxu0
    %v192 = vadd.f32 0.0, %v191
    %193 = vmatmul.f32.gmra.mxu0 %v162
    %v194 = vpop.f32.mrf.mxu0
    %v195 = vadd.f32 0.0, %v194
    %196 = vdwg.mxu0
    %197 = vmatpush.msra.mxu0 0.0
    %198 = vmatpush.msra.mxu0 0.0
    %199 = vmatpush.msra.mxu0 0.0
    %200 = vmatpush.msra.mxu0 0.0
    %201 = vmatpush.msra.mxu0 0.0
    %202 = vmatpush.msra.mxu0 0.0
    %203 = vmatpush.msra.mxu0 0.0
    %204 = vmatpush.msra.mxu0 0.0
    %205 = vmatpush.msra.mxu0 %v169
    %206 = vmatpush.msra.mxu0 %v152
    %207 = vmatpush.msra.mxu0 %v149
    %208 = vmatpush.msra.mxu0 %v146
    %209 = vmatpush.msra.mxu0 %v143
    %210 = vmatpush.msra.mxu0 %v140
    %211 = vmatpush.msra.mxu0 %v137
    %212 = vmatpush.msra.mxu0 %v134
    %213 = vmatmul.f32.gmra.mxu0 %v159
    %v214 = vpop.f32.mrf.mxu0
    %v215 = vadd.f32 0.0, %v214
    %216 = vmatmul.f32.gmra.mxu0 %v162
    %v217 = vpop.f32.mrf.mxu0
    %v218 = vadd.f32 0.0, %v217
    %219 = vdwg.mxu0
    %220 = vmatpush.msra.mxu0 0.0
    %221 = vmatpush.msra.mxu0 0.0
    %222 = vmatpush.msra.mxu0 0.0
    %223 = vmatpush.msra.mxu0 0.0
    %224 = vmatpush.msra.mxu0 0.0
    %225 = vmatpush.msra.mxu0 0.0
    %226 = vmatpush.msra.mxu0 0.0
    %227 = vmatpush.msra.mxu0 0.0
    %228 = vmatpush.msra.mxu0 %v172
    %229 = vmatpush.msra.mxu0 %v153
    %230 = vmatpush.msra.mxu0 %v150
    %231 = vmatpush.msra.mxu0 %v147
    %232 = vmatpush.msra.mxu0 %v144
    %233 = vmatpush.msra.mxu0 %v141
    %234 = vmatpush.msra.mxu0 %v138
    %235 = vmatpush.msra.mxu0 %v135
    %236 = vmatmul.f32.gmra.mxu0 %v159
    %v237 = vpop.f32.mrf.mxu0
    %v238 = vadd.f32 0.0, %v237
    %239 = vmatmul.f32.gmra.mxu0 %v162
    %v240 = vpop.f32.mrf.mxu0
    %v241 = vadd.f32 0.0, %v240
    %242 = vdwg.mxu0
    %v243 = vld [vmem:[#allocation5] sm:$0xff]
    %v244 = vld [vmem:[#allocation5 + $0x8] sm:$0xff]
    %v245 = vld [vmem:[#allocation5 + $0x10] sm:$0xff]
    %v246 = vld [vmem:[#allocation5 + $0x18] sm:$0xff]
    %v247 = vld [vmem:[#allocation5 + $0x20] sm:$0xff]
    %v248 = vld [vmem:[#allocation5 + $0x28] sm:$0xff]
    %v249 = vld [vmem:[#allocation5 + $0x30] sm:$0xff]
    %v250 = vld [vmem:[#allocation5 + $0x38] sm:$0xff]
    %v251 = vld [vmem:[#allocation5 + $0x40] sm:$0xff]
    %v252 = vld [vmem:[#allocation5 + $0x48] sm:$0xff]
    %v253 = vld [vmem:[#allocation5 + $0x50] sm:$0xff]
    %v254 = vld [vmem:[#allocation5 + $0x58] sm:$0xff]
    %v255 = vld [vmem:[#allocation5 + $0x60] sm:$0xff]
    %v256 = vld [vmem:[#allocation5 + $0x68] sm:$0xff]
    %v257 = vld [vmem:[#allocation5 + $0x70] sm:$0xff]
    %v258 = vld [vmem:[#allocation5 + $0x78] sm:$0xff]
    %v259 = vld [vmem:[#allocation5 + $0x80] sm:$0xff]
    %v260 = vld [vmem:[#allocation5 + $0x88] sm:$0xff]
    %v261 = vld [vmem:[#allocation5 + $0x90] sm:$0x3]
    %v262 = vld [vmem:[#allocation5 + $0x98] sm:$0x3]
    %v263 = vld [vmem:[#allocation5 + $0xa0] sm:$0x3]
    %vm264 = vcmask 408576
    %v266 = vsel %vm264, %v131, 0
    %v269 = vsel %vm264, %v132, 0
    %vm271 = vcmask 1041408
    %v273 = vsel %vm271, %v261, 0
    %v276 = vsel %vm271, %v262, 0
    %v279 = vsel %vm271, %v263, 0
    %281 = vmatpush.msra.mxu0 0.0
    %282 = vmatpush.msra.mxu0 0.0
    %283 = vmatpush.msra.mxu0 0.0
    %284 = vmatpush.msra.mxu0 0.0
    %285 = vmatpush.msra.mxu0 0.0
    %286 = vmatpush.msra.mxu0 0.0
    %287 = vmatpush.msra.mxu0 0.0
    %288 = vmatpush.msra.mxu0 0.0
    %289 = vmatpush.msra.mxu0 0.0
    %290 = vmatpush.msra.mxu0 %v273
    %291 = vmatpush.msra.mxu0 %v258
    %292 = vmatpush.msra.mxu0 %v255
    %293 = vmatpush.msra.mxu0 %v252
    %294 = vmatpush.msra.mxu0 %v249
    %295 = vmatpush.msra.mxu0 %v246
    %296 = vmatpush.msra.mxu0 %v243
    %297 = vmatmul.f32.gmra.mxu0 %v266
    %v298 = vpop.f32.mrf.mxu0
    %v299 = vadd.f32 0.0, %v298
    %300 = vmatmul.f32.gmra.mxu0 %v269
    %v301 = vpop.f32.mrf.mxu0
    %v302 = vadd.f32 0.0, %v301
    %303 = vdwg.mxu0
    %304 = vmatpush.msra.mxu0 0.0
    %305 = vmatpush.msra.mxu0 0.0
    %306 = vmatpush.msra.mxu0 0.0
    %307 = vmatpush.msra.mxu0 0.0
    %308 = vmatpush.msra.mxu0 0.0
    %309 = vmatpush.msra.mxu0 0.0
    %310 = vmatpush.msra.mxu0 0.0
    %311 = vmatpush.msra.mxu0 0.0
    %312 = vmatpush.msra.mxu0 0.0
    %313 = vmatpush.msra.mxu0 %v276
    %314 = vmatpush.msra.mxu0 %v259
    %315 = vmatpush.msra.mxu0 %v256
    %316 = vmatpush.msra.mxu0 %v253
    %317 = vmatpush.msra.mxu0 %v250
    %318 = vmatpush.msra.mxu0 %v247
    %319 = vmatpush.msra.mxu0 %v244
    %320 = vmatmul.f32.gmra.mxu0 %v266
    %v321 = vpop.f32.mrf.mxu0
    %v322 = vadd.f32 0.0, %v321
    %323 = vmatmul.f32.gmra.mxu0 %v269
    %v324 = vpop.f32.mrf.mxu0
    %v325 = vadd.f32 0.0, %v324
    %326 = vdwg.mxu0
    %327 = vmatpush.msra.mxu0 0.0
    %328 = vmatpush.msra.mxu0 0.0
    %329 = vmatpush.msra.mxu0 0.0
    %330 = vmatpush.msra.mxu0 0.0
    %331 = vmatpush.msra.mxu0 0.0
    %332 = vmatpush.msra.mxu0 0.0
    %333 = vmatpush.msra.mxu0 0.0
    %334 = vmatpush.msra.mxu0 0.0
    %335 = vmatpush.msra.mxu0 0.0
    %336 = vmatpush.msra.mxu0 %v279
    %337 = vmatpush.msra.mxu0 %v260
    %338 = vmatpush.msra.mxu0 %v257
    %339 = vmatpush.msra.mxu0 %v254
    %340 = vmatpush.msra.mxu0 %v251
    %341 = vmatpush.msra.mxu0 %v248
    %342 = vmatpush.msra.mxu0 %v245
    %343 = vmatmul.f32.gmra.mxu0 %v266
    %v344 = vpop.f32.mrf.mxu0
    %v345 = vadd.f32 0.0, %v344
    %346 = vmatmul.f32.gmra.mxu0 %v269
    %v347 = vpop.f32.mrf.mxu0
    %v348 = vadd.f32 0.0, %v347
    %349 = vdwg.mxu0
    %v350 = vld [vmem:[%s4] sm:$0xff]
    %v351 = vld [vmem:[%s4 + $0x8] sm:$0xff]
    %v352 = vld [vmem:[%s4 + $0x10] sm:$0xff]
    %v353 = vld [vmem:[%s4 + $0x18] sm:$0xff]
    %v354 = vld [vmem:[%s4 + $0x20] sm:$0xff]
    %v355 = vld [vmem:[%s4 + $0x28] sm:$0xff]
    %v356 = vld [vmem:[%s4 + $0x30] sm:$0xff]
    %v357 = vld [vmem:[%s4 + $0x38] sm:$0xff]
    %v358 = vld [vmem:[%s4 + $0x40] sm:$0xff]
    %v359 = vld [vmem:[%s4 + $0x48] sm:$0xff]
    %v360 = vld [vmem:[%s4 + $0x50] sm:$0xff]
    %v361 = vld [vmem:[%s4 + $0x58] sm:$0xff]
    %v362 = vld [vmem:[%s4 + $0x60] sm:$0xff]
    %v363 = vld [vmem:[%s4 + $0x68] sm:$0xff]
    %v364 = vld [vmem:[%s4 + $0x70] sm:$0xff]
    %v365 = vld [vmem:[%s4 + $0x78] sm:$0xff]
    %v366 = vld [vmem:[%s4 + $0x80] sm:$0xff]
    %v367 = vld [vmem:[%s4 + $0x88] sm:$0xff]
    %v368 = vld [vmem:[%s4 + $0x90] sm:$0xff]
    %v369 = vld [vmem:[%s4 + $0x98] sm:$0xff]
    %v370 = vld [vmem:[%s4 + $0xa0] sm:$0xff]
    %v371 = vld [vmem:[%s4 + $0xa8] sm:$0xff]
    %v372 = vld [vmem:[%s4 + $0xb0] sm:$0xff]
    %v373 = vld [vmem:[%s4 + $0xb8] sm:$0xff]
    %v374 = vld [vmem:[%s4 + $0xc0] sm:$0xff]
    %v375 = vld [vmem:[%s4 + $0xc8] sm:$0xff]
    %v376 = vld [vmem:[%s4 + $0xd0] sm:$0xff]
    %v377 = vld [vmem:[%s4 + $0xd8] sm:$0xff]
    %v378 = vld [vmem:[%s4 + $0xe0] sm:$0xff]
    %v379 = vld [vmem:[%s4 + $0xe8] sm:$0xff]
    %v380 = vld [vmem:[%s4 + $0xf0] sm:$0xff]
    %v381 = vld [vmem:[%s4 + $0xf8] sm:$0xff]
    %v382 = vld [vmem:[%s4 + $0x100] sm:$0xff]
    %v383 = vld [vmem:[%s4 + $0x108] sm:$0xff]
    %v384 = vld [vmem:[%s4 + $0x110] sm:$0xff]
    %v385 = vld [vmem:[%s4 + $0x118] sm:$0xff]
    %v386 = vld [vmem:[%s4 + $0x120] sm:$0xff]
    %v387 = vld [vmem:[%s4 + $0x128] sm:$0xff]
    %v388 = vld [vmem:[%s4 + $0x130] sm:$0xff]
    %v389 = vld [vmem:[%s4 + $0x138] sm:$0xff]
    %v390 = vld [vmem:[%s4 + $0x140] sm:$0xff]
    %v391 = vld [vmem:[%s4 + $0x148] sm:$0xff]
    %v392 = vld [vmem:[%s4 + $0x150] sm:$0xff]
    %v393 = vld [vmem:[%s4 + $0x158] sm:$0xff]
    %v394 = vld [vmem:[%s4 + $0x160] sm:$0xff]
    %v395 = vld [vmem:[%s4 + $0x168] sm:$0xff]
    %v396 = vld [vmem:[%s4 + $0x170] sm:$0xff]
    %v397 = vld [vmem:[%s4 + $0x178] sm:$0xff]
    %v398 = vld [vmem:[%s4 + $0x180] sm:$0xff]
    %v399 = vld [vmem:[%s4 + $0x188] sm:$0xff]
    %v400 = vld [vmem:[%s4 + $0x190] sm:$0xff]
    %v401 = vld [vmem:[%s4 + $0x198] sm:$0xff]
    %v402 = vld [vmem:[%s4 + $0x1a0] sm:$0xff]
    %v403 = vld [vmem:[%s4 + $0x1a8] sm:$0xff]
    %v404 = vld [vmem:[%s4 + $0x1b0] sm:$0xff]
    %v405 = vld [vmem:[%s4 + $0x1b8] sm:$0xff]
    %v406 = vld [vmem:[%s4 + $0x1c0] sm:$0xff]
    %v407 = vld [vmem:[%s4 + $0x1c8] sm:$0xff]
    %v408 = vld [vmem:[%s4 + $0x1d0] sm:$0xff]
    %v409 = vld [vmem:[%s4 + $0x1d8] sm:$0xff]
    %v410 = vld [vmem:[%s4 + $0x1e0] sm:$0xff]
    %v411 = vld [vmem:[%s4 + $0x1e8] sm:$0xff]
    %v412 = vld [vmem:[%s4 + $0x1f0] sm:$0xff]
    %v413 = vld [vmem:[%s4 + $0x1f8] sm:$0xff]
    %v414 = vld [vmem:[%s4 + $0x200] sm:$0xff]
    %v415 = vld [vmem:[%s4 + $0x208] sm:$0xff]
    %v416 = vld [vmem:[%s4 + $0x210] sm:$0xff]
    %v417 = vld [vmem:[%s4 + $0x218] sm:$0xff]
    %v418 = vld [vmem:[%s4 + $0x220] sm:$0xff]
    %v419 = vld [vmem:[%s4 + $0x228] sm:$0xff]
    %v420 = vld [vmem:[%s4 + $0x230] sm:$0xff]
    %v421 = vld [vmem:[%s4 + $0x238] sm:$0xff]
    %v422 = vld [vmem:[%s4 + $0x240] sm:$0xff]
    %v423 = vld [vmem:[%s4 + $0x248] sm:$0xff]
    %v424 = vld [vmem:[%s4 + $0x250] sm:$0xf]
    %v425 = vld [vmem:[%s4 + $0x258] sm:$0xf]
    %v426 = vld [vmem:[#allocation7] sm:$0xff]
    %v427 = vld [vmem:[#allocation7 + $0x8] sm:$0xff]
    %v428 = vld [vmem:[#allocation7 + $0x10] sm:$0xff]
    %v429 = vld [vmem:[#allocation7 + $0x18] sm:$0xff]
    %v430 = vld [vmem:[#allocation7 + $0x20] sm:$0xff]
    %v431 = vld [vmem:[#allocation7 + $0x28] sm:$0xff]
    %v432 = vld [vmem:[#allocation7 + $0x30] sm:$0xff]
    %v433 = vld [vmem:[#allocation7 + $0x38] sm:$0xff]
    %v434 = vld [vmem:[#allocation7 + $0x40] sm:$0xff]
    %v435 = vld [vmem:[#allocation7 + $0x48] sm:$0xff]
    %v436 = vld [vmem:[#allocation7 + $0x50] sm:$0xff]
    %v437 = vld [vmem:[#allocation7 + $0x58] sm:$0xff]
    %v438 = vld [vmem:[#allocation7 + $0x60] sm:$0xff]
    %v439 = vld [vmem:[#allocation7 + $0x68] sm:$0xff]
    %v440 = vld [vmem:[#allocation7 + $0x70] sm:$0xff]
    %v441 = vld [vmem:[#allocation7 + $0x78] sm:$0xff]
    %v442 = vld [vmem:[#allocation7 + $0x80] sm:$0xff]
    %v443 = vld [vmem:[#allocation7 + $0x88] sm:$0xff]
    %v444 = vld [vmem:[#allocation7 + $0x90] sm:$0xff]
    %v445 = vld [vmem:[#allocation7 + $0x98] sm:$0xff]
    %v446 = vld [vmem:[#allocation7 + $0xa0] sm:$0xff]
    %v447 = vld [vmem:[#allocation7 + $0xa8] sm:$0xff]
    %v448 = vld [vmem:[#allocation7 + $0xb0] sm:$0xff]
    %v449 = vld [vmem:[#allocation7 + $0xb8] sm:$0xff]
    %v450 = vld [vmem:[#allocation7 + $0xc0] sm:$0xff]
    %v451 = vld [vmem:[#allocation7 + $0xc8] sm:$0xff]
    %v452 = vld [vmem:[#allocation7 + $0xd0] sm:$0xff]
    %v453 = vld [vmem:[#allocation7 + $0xd8] sm:$0xff]
    %v454 = vld [vmem:[#allocation7 + $0xe0] sm:$0xff]
    %v455 = vld [vmem:[#allocation7 + $0xe8] sm:$0xff]
    %v456 = vld [vmem:[#allocation7 + $0xf0] sm:$0xff]
    %v457 = vld [vmem:[#allocation7 + $0xf8] sm:$0xff]
    %v458 = vld [vmem:[#allocation7 + $0x100] sm:$0xff]
    %v459 = vld [vmem:[#allocation7 + $0x108] sm:$0xff]
    %v460 = vld [vmem:[#allocation7 + $0x110] sm:$0xff]
    %v461 = vld [vmem:[#allocation7 + $0x118] sm:$0xff]
    %v462 = vld [vmem:[#allocation7 + $0x120] sm:$0xff]
    %v463 = vld [vmem:[#allocation7 + $0x128] sm:$0xff]
    %v464 = vld [vmem:[#allocation7 + $0x130] sm:$0xff]
    %v465 = vld [vmem:[#allocation7 + $0x138] sm:$0xff]
    %v466 = vld [vmem:[#allocation7 + $0x140] sm:$0xff]
    %v467 = vld [vmem:[#allocation7 + $0x148] sm:$0xff]
    %v468 = vld [vmem:[#allocation7 + $0x150] sm:$0xff]
    %v469 = vld [vmem:[#allocation7 + $0x158] sm:$0xff]
    %v470 = vld [vmem:[#allocation7 + $0x160] sm:$0xff]
    %v471 = vld [vmem:[#allocation7 + $0x168] sm:$0xff]
    %v472 = vld [vmem:[#allocation7 + $0x170] sm:$0xff]
    %v473 = vld [vmem:[#allocation7 + $0x178] sm:$0xff]
    %v474 = vld [vmem:[#allocation7 + $0x180] sm:$0xff]
    %v475 = vld [vmem:[#allocation7 + $0x188] sm:$0xff]
    %v476 = vld [vmem:[#allocation7 + $0x190] sm:$0xff]
    %v477 = vld [vmem:[#allocation7 + $0x198] sm:$0xff]
    %v478 = vld [vmem:[#allocation7 + $0x1a0] sm:$0xff]
    %v479 = vld [vmem:[#allocation7 + $0x1a8] sm:$0xff]
    %v480 = vld [vmem:[#allocation7 + $0x1b0] sm:$0xff]
    %v481 = vld [vmem:[#allocation7 + $0x1b8] sm:$0xff]
    %v482 = vld [vmem:[#allocation7 + $0x1c0] sm:$0xff]
    %v483 = vld [vmem:[#allocation7 + $0x1c8] sm:$0xff]
    %v484 = vld [vmem:[#allocation7 + $0x1d0] sm:$0xff]
    %v485 = vld [vmem:[#allocation7 + $0x1d8] sm:$0xff]
    %v486 = vld [vmem:[#allocation7 + $0x1e0] sm:$0xff]
    %v487 = vld [vmem:[#allocation7 + $0x1e8] sm:$0xff]
    %v488 = vld [vmem:[#allocation7 + $0x1f0] sm:$0xff]
    %v489 = vld [vmem:[#allocation7 + $0x1f8] sm:$0xff]
    %v490 = vld [vmem:[#allocation7 + $0x200] sm:$0xff]
    %v491 = vld [vmem:[#allocation7 + $0x208] sm:$0xff]
    %v492 = vld [vmem:[#allocation7 + $0x210] sm:$0xff]
    %v493 = vld [vmem:[#allocation7 + $0x218] sm:$0xff]
    %v494 = vld [vmem:[#allocation7 + $0x220] sm:$0xff]
    %v495 = vld [vmem:[#allocation7 + $0x228] sm:$0xff]
    %v496 = vld [vmem:[#allocation7 + $0x230] sm:$0xff]
    %v497 = vld [vmem:[#allocation7 + $0x238] sm:$0xff]
    %v498 = vld [vmem:[#allocation7 + $0x240] sm:$0xff]
    %v499 = vld [vmem:[#allocation7 + $0x248] sm:$0xff]
    %v500 = vld [vmem:[#allocation7 + $0x250] sm:$0xf]
    %v501 = vld [vmem:[#allocation7 + $0x258] sm:$0xf]
    %vm502 = vcmask 359424
    %v504 = vsel %vm502, %v345, 0
    %v507 = vsel %vm502, %v348, 0
    %v510 = vsel %vm164, %v500, 0
    %v513 = vsel %vm164, %v501, 0
    %515 = vmatpush.msra.mxu0 %v456
    %516 = vmatpush.msra.mxu0 %v454
    %517 = vmatpush.msra.mxu0 %v452
    %518 = vmatpush.msra.mxu0 %v450
    %519 = vmatpush.msra.mxu0 %v448
    %520 = vmatpush.msra.mxu0 %v446
    %521 = vmatpush.msra.mxu0 %v444
    %522 = vmatpush.msra.mxu0 %v442
    %523 = vmatpush.msra.mxu0 %v440
    %524 = vmatpush.msra.mxu0 %v438
    %525 = vmatpush.msra.mxu0 %v436
    %526 = vmatpush.msra.mxu0 %v434
    %527 = vmatpush.msra.mxu0 %v432
    %528 = vmatpush.msra.mxu0 %v430
    %529 = vmatpush.msra.mxu0 %v428
    %530 = vmatpush.msra.mxu0 %v426
    %531 = vmatmul.f32.gmra.mxu0 %v299
    %v532 = vpop.f32.mrf.mxu0
    %v533 = vadd.f32 0.0, %v532
    %534 = vmatmul.f32.gmra.mxu0 %v302
    %v535 = vpop.f32.mrf.mxu0
    %v536 = vadd.f32 0.0, %v535
    %537 = vdwg.mxu0
    %538 = vmatpush.msra.mxu0 %v488
    %539 = vmatpush.msra.mxu0 %v486
    %540 = vmatpush.msra.mxu0 %v484
    %541 = vmatpush.msra.mxu0 %v482
    %542 = vmatpush.msra.mxu0 %v480
    %543 = vmatpush.msra.mxu0 %v478
    %544 = vmatpush.msra.mxu0 %v476
    %545 = vmatpush.msra.mxu0 %v474
    %546 = vmatpush.msra.mxu0 %v472
    %547 = vmatpush.msra.mxu0 %v470
    %548 = vmatpush.msra.mxu0 %v468
    %549 = vmatpush.msra.mxu0 %v466
    %550 = vmatpush.msra.mxu0 %v464
    %551 = vmatpush.msra.mxu0 %v462
    %552 = vmatpush.msra.mxu0 %v460
    %553 = vmatpush.msra.mxu0 %v458
    %554 = vmatmul.f32.gmra.mxu0 %v322
    %v555 = vpop.f32.mrf.mxu0
    %v556 = vadd.f32 %v533, %v555
    %557 = vmatmul.f32.gmra.mxu0 %v325
    %v558 = vpop.f32.mrf.mxu0
    %v559 = vadd.f32 %v536, %v558
    %560 = vdwg.mxu0
    %561 = vmatpush.msra.mxu0 0.0
    %562 = vmatpush.msra.mxu0 0.0
    %563 = vmatpush.msra.mxu0 0.0
    %564 = vmatpush.msra.mxu0 0.0
    %565 = vmatpush.msra.mxu0 0.0
    %566 = vmatpush.msra.mxu0 0.0
    %567 = vmatpush.msra.mxu0 0.0
    %568 = vmatpush.msra.mxu0 0.0
    %569 = vmatpush.msra.mxu0 0.0
    %570 = vmatpush.msra.mxu0 0.0
    %571 = vmatpush.msra.mxu0 %v510
    %572 = vmatpush.msra.mxu0 %v498
    %573 = vmatpush.msra.mxu0 %v496
    %574 = vmatpush.msra.mxu0 %v494
    %575 = vmatpush.msra.mxu0 %v492
    %576 = vmatpush.msra.mxu0 %v490
    %577 = vmatmul.f32.gmra.mxu0 %v504
    %v578 = vpop.f32.mrf.mxu0
    %v579 = vadd.f32 %v556, %v578
    %580 = vmatmul.f32.gmra.mxu0 %v507
    %v581 = vpop.f32.mrf.mxu0
    %v582 = vadd.f32 %v559, %v581
    %583 = vdwg.mxu0
    %584 = vmatpush.msra.mxu0 %v457
    %585 = vmatpush.msra.mxu0 %v455
    %586 = vmatpush.msra.mxu0 %v453
    %587 = vmatpush.msra.mxu0 %v451
    %588 = vmatpush.msra.mxu0 %v449
    %589 = vmatpush.msra.mxu0 %v447
    %590 = vmatpush.msra.mxu0 %v445
    %591 = vmatpush.msra.mxu0 %v443
    %592 = vmatpush.msra.mxu0 %v441
    %593 = vmatpush.msra.mxu0 %v439
    %594 = vmatpush.msra.mxu0 %v437
    %595 = vmatpush.msra.mxu0 %v435
    %596 = vmatpush.msra.mxu0 %v433
    %597 = vmatpush.msra.mxu0 %v431
    %598 = vmatpush.msra.mxu0 %v429
    %599 = vmatpush.msra.mxu0 %v427
    %600 = vmatmul.f32.gmra.mxu0 %v299
    %v601 = vpop.f32.mrf.mxu0
    %v602 = vadd.f32 0.0, %v601
    %603 = vmatmul.f32.gmra.mxu0 %v302
    %v604 = vpop.f32.mrf.mxu0
    %v605 = vadd.f32 0.0, %v604
    %606 = vdwg.mxu0
    %607 = vmatpush.msra.mxu0 %v489
    %608 = vmatpush.msra.mxu0 %v487
    %609 = vmatpush.msra.mxu0 %v485
    %610 = vmatpush.msra.mxu0 %v483
    %611 = vmatpush.msra.mxu0 %v481
    %612 = vmatpush.msra.mxu0 %v479
    %613 = vmatpush.msra.mxu0 %v477
    %614 = vmatpush.msra.mxu0 %v475
    %615 = vmatpush.msra.mxu0 %v473
    %616 = vmatpush.msra.mxu0 %v471
    %617 = vmatpush.msra.mxu0 %v469
    %618 = vmatpush.msra.mxu0 %v467
    %619 = vmatpush.msra.mxu0 %v465
    %620 = vmatpush.msra.mxu0 %v463
    %621 = vmatpush.msra.mxu0 %v461
    %622 = vmatpush.msra.mxu0 %v459
    %623 = vmatmul.f32.gmra.mxu0 %v322
    %v624 = vpop.f32.mrf.mxu0
    %v625 = vadd.f32 %v602, %v624
    %626 = vmatmul.f32.gmra.mxu0 %v325
    %v627 = vpop.f32.mrf.mxu0
    %v628 = vadd.f32 %v605, %v627
    %629 = vdwg.mxu0
    %630 = vmatpush.msra.mxu0 0.0
    %631 = vmatpush.msra.mxu0 0.0
    %632 = vmatpush.msra.mxu0 0.0
    %633 = vmatpush.msra.mxu0 0.0
    %634 = vmatpush.msra.mxu0 0.0
    %635 = vmatpush.msra.mxu0 0.0
    %636 = vmatpush.msra.mxu0 0.0
    %637 = vmatpush.msra.mxu0 0.0
    %638 = vmatpush.msra.mxu0 0.0
    %639 = vmatpush.msra.mxu0 0.0
    %640 = vmatpush.msra.mxu0 %v513
    %641 = vmatpush.msra.mxu0 %v499
    %642 = vmatpush.msra.mxu0 %v497
    %643 = vmatpush.msra.mxu0 %v495
    %644 = vmatpush.msra.mxu0 %v493
    %645 = vmatpush.msra.mxu0 %v491
    %646 = vmatmul.f32.gmra.mxu0 %v504
    %v647 = vpop.f32.mrf.mxu0
    %v648 = vadd.f32 %v625, %v647
    %649 = vmatmul.f32.gmra.mxu0 %v507
    %v650 = vpop.f32.mrf.mxu0
    %v651 = vadd.f32 %v628, %v650
    %652 = vdwg.mxu0
    %v654 = vsel %vm502, %v238, 0
    %v657 = vsel %vm502, %v241, 0
    %v660 = vsel %vm164, %v424, 0
    %v663 = vsel %vm164, %v425, 0
    %665 = vmatpush.msra.mxu0 %v380
    %666 = vmatpush.msra.mxu0 %v378
    %667 = vmatpush.msra.mxu0 %v376
    %668 = vmatpush.msra.mxu0 %v374
    %669 = vmatpush.msra.mxu0 %v372
    %670 = vmatpush.msra.mxu0 %v370
    %671 = vmatpush.msra.mxu0 %v368
    %672 = vmatpush.msra.mxu0 %v366
    %673 = vmatpush.msra.mxu0 %v364
    %674 = vmatpush.msra.mxu0 %v362
    %675 = vmatpush.msra.mxu0 %v360
    %676 = vmatpush.msra.mxu0 %v358
    %677 = vmatpush.msra.mxu0 %v356
    %678 = vmatpush.msra.mxu0 %v354
    %679 = vmatpush.msra.mxu0 %v352
    %680 = vmatpush.msra.mxu0 %v350
    %681 = vmatmul.f32.gmra.mxu0 %v192
    %v682 = vpop.f32.mrf.mxu0
    %v683 = vadd.f32 %v579, %v682
    %684 = vmatmul.f32.gmra.mxu0 %v195
    %v685 = vpop.f32.mrf.mxu0
    %v686 = vadd.f32 %v582, %v685
    %687 = vdwg.mxu0
    %688 = vmatpush.msra.mxu0 %v412
    %689 = vmatpush.msra.mxu0 %v410
    %690 = vmatpush.msra.mxu0 %v408
    %691 = vmatpush.msra.mxu0 %v406
    %692 = vmatpush.msra.mxu0 %v404
    %693 = vmatpush.msra.mxu0 %v402
    %694 = vmatpush.msra.mxu0 %v400
    %695 = vmatpush.msra.mxu0 %v398
    %696 = vmatpush.msra.mxu0 %v396
    %697 = vmatpush.msra.mxu0 %v394
    %698 = vmatpush.msra.mxu0 %v392
    %699 = vmatpush.msra.mxu0 %v390
    %700 = vmatpush.msra.mxu0 %v388
    %701 = vmatpush.msra.mxu0 %v386
    %702 = vmatpush.msra.mxu0 %v384
    %703 = vmatpush.msra.mxu0 %v382
    %704 = vmatmul.f32.gmra.mxu0 %v215
    %v705 = vpop.f32.mrf.mxu0
    %v706 = vadd.f32 %v683, %v705
    %707 = vmatmul.f32.gmra.mxu0 %v218
    %v708 = vpop.f32.mrf.mxu0
    %v709 = vadd.f32 %v686, %v708
    %710 = vdwg.mxu0
    %711 = vmatpush.msra.mxu0 0.0
    %712 = vmatpush.msra.mxu0 0.0
    %713 = vmatpush.msra.mxu0 0.0
    %714 = vmatpush.msra.mxu0 0.0
    %715 = vmatpush.msra.mxu0 0.0
    %716 = vmatpush.msra.mxu0 0.0
    %717 = vmatpush.msra.mxu0 0.0
    %718 = vmatpush.msra.mxu0 0.0
    %719 = vmatpush.msra.mxu0 0.0
    %720 = vmatpush.msra.mxu0 0.0
    %721 = vmatpush.msra.mxu0 %v660
    %722 = vmatpush.msra.mxu0 %v422
    %723 = vmatpush.msra.mxu0 %v420
    %724 = vmatpush.msra.mxu0 %v418
    %725 = vmatpush.msra.mxu0 %v416
    %726 = vmatpush.msra.mxu0 %v414
    %727 = vmatmul.f32.gmra.mxu0 %v654
    %v728 = vpop.f32.mrf.mxu0
    %v729 = vadd.f32 %v706, %v728
    %730 = vmatmul.f32.gmra.mxu0 %v657
    %v731 = vpop.f32.mrf.mxu0
    %v732 = vadd.f32 %v709, %v731
    %733 = vdwg.mxu0
    %734 = vmatpush.msra.mxu0 %v381
    %735 = vmatpush.msra.mxu0 %v379
    %736 = vmatpush.msra.mxu0 %v377
    %737 = vmatpush.msra.mxu0 %v375
    %738 = vmatpush.msra.mxu0 %v373
    %739 = vmatpush.msra.mxu0 %v371
    %740 = vmatpush.msra.mxu0 %v369
    %741 = vmatpush.msra.mxu0 %v367
    %742 = vmatpush.msra.mxu0 %v365
    %743 = vmatpush.msra.mxu0 %v363
    %744 = vmatpush.msra.mxu0 %v361
    %745 = vmatpush.msra.mxu0 %v359
    %746 = vmatpush.msra.mxu0 %v357
    %747 = vmatpush.msra.mxu0 %v355
    %748 = vmatpush.msra.mxu0 %v353
    %749 = vmatpush.msra.mxu0 %v351
    %750 = vmatmul.f32.gmra.mxu0 %v192
    %v751 = vpop.f32.mrf.mxu0
    %v752 = vadd.f32 %v648, %v751
    %753 = vmatmul.f32.gmra.mxu0 %v195
    %v754 = vpop.f32.mrf.mxu0
    %v755 = vadd.f32 %v651, %v754
    %756 = vdwg.mxu0
    %757 = vmatpush.msra.mxu0 %v413
    %758 = vmatpush.msra.mxu0 %v411
    %759 = vmatpush.msra.mxu0 %v409
    %760 = vmatpush.msra.mxu0 %v407
    %761 = vmatpush.msra.mxu0 %v405
    %762 = vmatpush.msra.mxu0 %v403
    %763 = vmatpush.msra.mxu0 %v401
    %764 = vmatpush.msra.mxu0 %v399
    %765 = vmatpush.msra.mxu0 %v397
    %766 = vmatpush.msra.mxu0 %v395
    %767 = vmatpush.msra.mxu0 %v393
    %768 = vmatpush.msra.mxu0 %v391
    %769 = vmatpush.msra.mxu0 %v389
    %770 = vmatpush.msra.mxu0 %v387
    %771 = vmatpush.msra.mxu0 %v385
    %772 = vmatpush.msra.mxu0 %v383
    %773 = vmatmul.f32.gmra.mxu0 %v215
    %v774 = vpop.f32.mrf.mxu0
    %v775 = vadd.f32 %v752, %v774
    %776 = vmatmul.f32.gmra.mxu0 %v218
    %v777 = vpop.f32.mrf.mxu0
    %v778 = vadd.f32 %v755, %v777
    %779 = vdwg.mxu0
    %780 = vmatpush.msra.mxu0 0.0
    %781 = vmatpush.msra.mxu0 0.0
    %782 = vmatpush.msra.mxu0 0.0
    %783 = vmatpush.msra.mxu0 0.0
    %784 = vmatpush.msra.mxu0 0.0
    %785 = vmatpush.msra.mxu0 0.0
    %786 = vmatpush.msra.mxu0 0.0
    %787 = vmatpush.msra.mxu0 0.0
    %788 = vmatpush.msra.mxu0 0.0
    %789 = vmatpush.msra.mxu0 0.0
    %790 = vmatpush.msra.mxu0 %v663
    %791 = vmatpush.msra.mxu0 %v423
    %792 = vmatpush.msra.mxu0 %v421
    %793 = vmatpush.msra.mxu0 %v419
    %794 = vmatpush.msra.mxu0 %v417
    %795 = vmatpush.msra.mxu0 %v415
    %796 = vmatmul.f32.gmra.mxu0 %v654
    %v797 = vpop.f32.mrf.mxu0
    %v798 = vadd.f32 %v775, %v797
    %799 = vmatmul.f32.gmra.mxu0 %v657
    %v800 = vpop.f32.mrf.mxu0
    %v801 = vadd.f32 %v778, %v800
    %802 = vdwg.mxu0
    %v803 = vld [vmem:[%s8] sm:$0x3]
    %v805 = vperm.slane %v803, 0
    %v806 = vperm.slane %v803, 1
    %v809 = vadd.f32 %v729, %v805
    %v810 = vadd.f32 %v798, %v806
    %v811 = vadd.f32 %v732, %v805
    %v812 = vadd.f32 %v801, %v806
    %813 = vst [vmem:[#allocation2] sm:$0xff] %v809
    %814 = vst [vmem:[#allocation2 + $0x8] sm:$0xff] %v810
    %815 = vst [vmem:[#allocation2 + $0x10] sm:$0xff] %v811
    %816 = vst [vmem:[#allocation2 + $0x18] sm:$0xff] %v812
    %v817 = vld [vmem:[%s6] sm:$0xff]
    %v818 = vld [vmem:[%s6 + $0x8] sm:$0xff]
    %v819 = vld [vmem:[%s6 + $0x10] sm:$0xff]
    %v820 = vld [vmem:[%s6 + $0x18] sm:$0xff]
    %v821 = vld [vmem:[%s7] sm:$0xff]
    %v822 = vld [vmem:[%s7 + $0x8] sm:$0xff]
    %v823 = vld [vmem:[%s7 + $0x10] sm:$0xff]
    %v824 = vld [vmem:[%s7 + $0x18] sm:$0xff]
    %v825 = vld [vmem:[%s9] sm:$0x3]
    %v826 = vld [vmem:[%s10] sm:$0x3]
    %s827 = scalar_lea.vmem %s9, 2
    %v828 = vld [vmem:[%s827] sm:$0x3]
    %s829 = scalar_lea.vmem %s10, 2
    %v830 = vld [vmem:[%s829] sm:$0x3]
    %v831 = vld [vmem:[#allocation2] sm:$0x3]
    %vm832 = vcmask 261120
    %v834 = vsel %vm832, %v825, 0
    %836 = vmatpush.msra.mxu0 0.0
    %837 = vmatpush.msra.mxu0 0.0
    %838 = vmatpush.msra.mxu0 0.0
    %839 = vmatpush.msra.mxu0 0.0
    %840 = vmatpush.msra.mxu0 0.0
    %841 = vmatpush.msra.mxu0 0.0
    %842 = vmatpush.msra.mxu0 0.0
    %843 = vmatpush.msra.mxu0 0.0
    %844 = vmatpush.msra.mxu0 0.0
    %845 = vmatpush.msra.mxu0 0.0
    %846 = vmatpush.msra.mxu0 0.0
    %847 = vmatpush.msra.mxu0 0.0
    %848 = vmatpush.msra.mxu0 %v820
    %849 = vmatpush.msra.mxu0 %v819
    %850 = vmatpush.msra.mxu0 %v818
    %851 = vmatpush.msra.mxu0 %v817
    %852 = vmatmul.f32.gmra.mxu0 %v834
    %v853 = vpop.f32.mrf.mxu0
    %v854 = vadd.f32 0.0, %v853
    %855 = vdwg.mxu0
    %v856 = vadd.f32 %v831, %v854
    %v857 = vxor.u32 %v856, 2147483648
    %v858 = vmul.f32 %v857, 1.442695
    %v859 = vpow.pop %v858
    %v860 = vadd.f32 %v859, 1.0
    %v861 = vrcp.pop %v860
    %v862 = vmul.f32 %v860, %v861
    %v863 = vsub.f32 1.0, %v862
    %v864 = vmul.f32 %v861, %v863
    %v865 = vadd.f32 %v861, %v864
    %vm866 = vweird.f32 %v860
    %vm867 = vweird.f32 %v861
    %vm868 = vmor %vm866, %vm867
    %v869 = vsel %vm868, %v861, %v865
    %v870 = vand.u32 2147483647, %v860
    %vm871 = vcmp.eq.f32.partialorder %v870, 8.507059e+37
    %v872 = vand.u32 %v860, 2147483648
    %v873 = vor.u32 1.1754944e-38, %v872
    %v874 = vsel %vm871, %v873, %v869
    %v875 = vmul.f32 1.0, %v874
    %v876 = vtanh.pop %v856
    %878 = vrot.lane.b32.xlu0 %v826, 32
    %v879 = vpop.permute.xlu0 %878
    %v881 = vmul.f32 %v875, %v879
    %883 = vrot.lane.b32.xlu0 %v876, 64
    %v884 = vpop.permute.xlu0 %883
    %v886 = vmul.f32 %v875, %v884
    %888 = vrot.lane.b32.xlu0 %v886, 32
    %v889 = vpop.permute.xlu0 %888
    %v891 = vadd.f32 %v881, %v889
    %v892 = vtanh.pop %v891
    %894 = vrot.lane.b32.xlu0 %v892, 64
    %v895 = vpop.permute.xlu0 %894
    %v897 = vmul.f32 %v875, %v895
    %899 = vrot.lane.b32.xlu0 %v897, 32
    %v900 = vpop.permute.xlu0 %899
    %vm902 = vcmask 254976
    %903 = vst.msk [vmem:[#allocation3] sm:$0x3] %vm902, %v900
    %v904 = vld [vmem:[#allocation2 + $0x18] sm:$0xc0]
    %v906 = vsel %vm832, %v828, 0
    %908 = vmatpush.msra.mxu0 0.0
    %909 = vmatpush.msra.mxu0 0.0
    %910 = vmatpush.msra.mxu0 0.0
    %911 = vmatpush.msra.mxu0 0.0
    %912 = vmatpush.msra.mxu0 0.0
    %913 = vmatpush.msra.mxu0 0.0
    %914 = vmatpush.msra.mxu0 0.0
    %915 = vmatpush.msra.mxu0 0.0
    %916 = vmatpush.msra.mxu0 0.0
    %917 = vmatpush.msra.mxu0 0.0
    %918 = vmatpush.msra.mxu0 0.0
    %919 = vmatpush.msra.mxu0 0.0
    %920 = vmatpush.msra.mxu0 %v824
    %921 = vmatpush.msra.mxu0 %v823
    %922 = vmatpush.msra.mxu0 %v822
    %923 = vmatpush.msra.mxu0 %v821
    %924 = vmatmul.f32.gmra.mxu0 %v906
    %v925 = vpop.f32.mrf.mxu0
    %v926 = vadd.f32 0.0, %v925
    %927 = vdwg.mxu0
    %v929 = vrot.slane %v926, 2
    %v931 = vadd.f32 %v904, %v929
    %v932 = vxor.u32 %v931, 2147483648
    %v933 = vmul.f32 %v932, 1.442695
    %v934 = vpow.pop %v933
    %v935 = vadd.f32 %v934, 1.0
    %v936 = vrcp.pop %v935
    %v937 = vmul.f32 %v935, %v936
    %v938 = vsub.f32 1.0, %v937
    %v939 = vmul.f32 %v936, %v938
    %v940 = vadd.f32 %v936, %v939
    %vm941 = vweird.f32 %v935
    %vm942 = vweird.f32 %v936
    %vm943 = vmor %vm941, %vm942
    %v944 = vsel %vm943, %v936, %v940
    %v945 = vand.u32 2147483647, %v935
    %vm946 = vcmp.eq.f32.partialorder %v945, 8.507059e+37
    %v947 = vand.u32 %v935, 2147483648
    %v948 = vor.u32 1.1754944e-38, %v947
    %v949 = vsel %vm946, %v948, %v944
    %v950 = vmul.f32 1.0, %v949
    %v951 = vtanh.pop %v931
    %v953 = vrot.slane %v830, 2
    %954 = vrot.lane.b32.xlu0 %v953, 32
    %v955 = vpop.permute.xlu0 %954
    %v957 = vmul.f32 %v950, %v955
    %959 = vrot.lane.b32.xlu0 %v951, 64
    %v960 = vpop.permute.xlu0 %959
    %v962 = vmul.f32 %v950, %v960
    %964 = vrot.lane.b32.xlu0 %v962, 32
    %v965 = vpop.permute.xlu0 %964
    %v967 = vadd.f32 %v957, %v965
    %v968 = vtanh.pop %v967
    %970 = vrot.lane.b32.xlu0 %v968, 64
    %v971 = vpop.permute.xlu0 %970
    %v973 = vmul.f32 %v950, %v971
    %975 = vrot.lane.b32.xlu0 %v973, 32
    %v976 = vpop.permute.xlu0 %975
    %vm978 = vcmask 261126
    %979 = vst.msk [vmem:[#allocation4 + $0x8] sm:$0xc0] %vm978, %v976
    %v980 = vld [vmem:[#allocation2] sm:$0xc]
    %v981 = vsel %vm832, %v900, 0
    %983 = vmatpush.msra.mxu0 0.0
    %984 = vmatpush.msra.mxu0 0.0
    %985 = vmatpush.msra.mxu0 0.0
    %986 = vmatpush.msra.mxu0 0.0
    %987 = vmatpush.msra.mxu0 0.0
    %988 = vmatpush.msra.mxu0 0.0
    %989 = vmatpush.msra.mxu0 0.0
    %990 = vmatpush.msra.mxu0 0.0
    %991 = vmatpush.msra.mxu0 0.0
    %992 = vmatpush.msra.mxu0 0.0
    %993 = vmatpush.msra.mxu0 0.0
    %994 = vmatpush.msra.mxu0 0.0
    %995 = vmatpush.msra.mxu0 %v820
    %996 = vmatpush.msra.mxu0 %v819
    %997 = vmatpush.msra.mxu0 %v818
    %998 = vmatpush.msra.mxu0 %v817
    %999 = vmatmul.f32.gmra.mxu0 %v981
    %v1000 = vpop.f32.mrf.mxu0
    %v1001 = vadd.f32 0.0, %v1000
    %1002 = vdwg.mxu0
    %v1004 = vrot.slane %v1001, 6
    %v1006 = vadd.f32 %v980, %v1004
    %v1007 = vxor.u32 %v1006, 2147483648
    %v1008 = vmul.f32 %v1007, 1.442695
    %v1009 = vpow.pop %v1008
    %v1010 = vadd.f32 %v1009, 1.0
    %v1011 = vrcp.pop %v1010
    %v1012 = vmul.f32 %v1010, %v1011
    %v1013 = vsub.f32 1.0, %v1012
    %v1014 = vmul.f32 %v1011, %v1013
    %v1015 = vadd.f32 %v1011, %v1014
    %vm1016 = vweird.f32 %v1010
    %vm1017 = vweird.f32 %v1011
    %vm1018 = vmor %vm1016, %vm1017
    %v1019 = vsel %vm1018, %v1011, %v1015
    %v1020 = vand.u32 2147483647, %v1010
    %vm1021 = vcmp.eq.f32.partialorder %v1020, 8.507059e+37
    %v1022 = vand.u32 %v1010, 2147483648
    %v1023 = vor.u32 1.1754944e-38, %v1022
    %v1024 = vsel %vm1021, %v1023, %v1019
    %v1025 = vmul.f32 1.0, %v1024
    %v1026 = vtanh.pop %v1006
    %v1028 = vrot.slane %v891, 6
    %v1030 = vmul.f32 %v1025, %v1028
    %1032 = vrot.lane.b32.xlu0 %v1026, 64
    %v1033 = vpop.permute.xlu0 %1032
    %v1035 = vmul.f32 %v1025, %v1033
    %1037 = vrot.lane.b32.xlu0 %v1035, 32
    %v1038 = vpop.permute.xlu0 %1037
    %v1040 = vadd.f32 %v1030, %v1038
    %v1041 = vtanh.pop %v1040
    %1043 = vrot.lane.b32.xlu0 %v1041, 64
    %v1044 = vpop.permute.xlu0 %1043
    %v1046 = vmul.f32 %v1025, %v1044
    %1048 = vrot.lane.b32.xlu0 %v1046, 32
    %v1049 = vpop.permute.xlu0 %1048
    %vm1051 = vcmask 257026
    %1052 = vst.msk [vmem:[#allocation3] sm:$0xc] %vm1051, %v1049
    %v1053 = vld [vmem:[#allocation2 + $0x18] sm:$0x30]
    %v1054 = vrot.slane %v973, 6
    %1055 = vrot.lane.b32.xlu0 %v1054, 32
    %v1056 = vpop.permute.xlu0 %1055
    %v1057 = vsel %vm832, %v1056, 0
    %1059 = vmatpush.msra.mxu0 0.0
    %1060 = vmatpush.msra.mxu0 0.0
    %1061 = vmatpush.msra.mxu0 0.0
    %1062 = vmatpush.msra.mxu0 0.0
    %1063 = vmatpush.msra.mxu0 0.0
    %1064 = vmatpush.msra.mxu0 0.0
    %1065 = vmatpush.msra.mxu0 0.0
    %1066 = vmatpush.msra.mxu0 0.0
    %1067 = vmatpush.msra.mxu0 0.0
    %1068 = vmatpush.msra.mxu0 0.0
    %1069 = vmatpush.msra.mxu0 0.0
    %1070 = vmatpush.msra.mxu0 0.0
    %1071 = vmatpush.msra.mxu0 %v824
    %1072 = vmatpush.msra.mxu0 %v823
    %1073 = vmatpush.msra.mxu0 %v822
    %1074 = vmatpush.msra.mxu0 %v821
    %1075 = vmatmul.f32.gmra.mxu0 %v1057
    %v1076 = vpop.f32.mrf.mxu0
    %v1077 = vadd.f32 0.0, %v1076
    %1078 = vdwg.mxu0
    %v1080 = vrot.slane %v1077, 4
    %v1082 = vadd.f32 %v1053, %v1080
    %v1083 = vxor.u32 %v1082, 2147483648
    %v1084 = vmul.f32 %v1083, 1.442695
    %v1085 = vpow.pop %v1084
    %v1086 = vadd.f32 %v1085, 1.0
    %v1087 = vrcp.pop %v1086
    %v1088 = vmul.f32 %v1086, %v1087
    %v1089 = vsub.f32 1.0, %v1088
    %v1090 = vmul.f32 %v1087, %v1089
    %v1091 = vadd.f32 %v1087, %v1090
    %vm1092 = vweird.f32 %v1086
    %vm1093 = vweird.f32 %v1087
    %vm1094 = vmor %vm1092, %vm1093
    %v1095 = vsel %vm1094, %v1087, %v1091
    %v1096 = vand.u32 2147483647, %v1086
    %vm1097 = vcmp.eq.f32.partialorder %v1096, 8.507059e+37
    %v1098 = vand.u32 %v1086, 2147483648
    %v1099 = vor.u32 1.1754944e-38, %v1098
    %v1100 = vsel %vm1097, %v1099, %v1095
    %v1101 = vmul.f32 1.0, %v1100
    %v1102 = vtanh.pop %v1082
    %v1104 = vrot.slane %v967, 2
    %v1106 = vmul.f32 %v1101, %v1104
    %1108 = vrot.lane.b32.xlu0 %v1102, 64
    %v1109 = vpop.permute.xlu0 %1108
    %v1111 = vmul.f32 %v1101, %v1109
    %1113 = vrot.lane.b32.xlu0 %v1111, 32
    %v1114 = vpop.permute.xlu0 %1113
    %v1116 = vadd.f32 %v1106, %v1114
    %v1117 = vtanh.pop %v1116
    %1119 = vrot.lane.b32.xlu0 %v1117, 64
    %v1120 = vpop.permute.xlu0 %1119
    %v1122 = vmul.f32 %v1101, %v1120
    %1124 = vrot.lane.b32.xlu0 %v1122, 32
    %v1125 = vpop.permute.xlu0 %1124
    %vm1127 = vcmask 259076
    %1128 = vst.msk [vmem:[#allocation4 + $0x8] sm:$0x30] %vm1127, %v1125
    %v1129 = vld [vmem:[#allocation2] sm:$0x30]
    %v1130 = vrot.slane %v1046, 2
    %1131 = vrot.lane.b32.xlu0 %v1130, 32
    %v1132 = vpop.permute.xlu0 %1131
    %v1133 = vsel %vm832, %v1132, 0
    %1135 = vmatpush.msra.mxu0 0.0
    %1136 = vmatpush.msra.mxu0 0.0
    %1137 = vmatpush.msra.mxu0 0.0
    %1138 = vmatpush.msra.mxu0 0.0
    %1139 = vmatpush.msra.mxu0 0.0
    %1140 = vmatpush.msra.mxu0 0.0
    %1141 = vmatpush.msra.mxu0 0.0
    %1142 = vmatpush.msra.mxu0 0.0
    %1143 = vmatpush.msra.mxu0 0.0
    %1144 = vmatpush.msra.mxu0 0.0
    %1145 = vmatpush.msra.mxu0 0.0
    %1146 = vmatpush.msra.mxu0 0.0
    %1147 = vmatpush.msra.mxu0 %v820
    %1148 = vmatpush.msra.mxu0 %v819
    %1149 = vmatpush.msra.mxu0 %v818
    %1150 = vmatpush.msra.mxu0 %v817
    %1151 = vmatmul.f32.gmra.mxu0 %v1133
    %v1152 = vpop.f32.mrf.mxu0
    %v1153 = vadd.f32 0.0, %v1152
    %1154 = vdwg.mxu0
    %v1156 = vrot.slane %v1153, 4
    %v1158 = vadd.f32 %v1129, %v1156
    %v1159 = vxor.u32 %v1158, 2147483648
    %v1160 = vmul.f32 %v1159, 1.442695
    %v1161 = vpow.pop %v1160
    %v1162 = vadd.f32 %v1161, 1.0
    %v1163 = vrcp.pop %v1162
    %v1164 = vmul.f32 %v1162, %v1163
    %v1165 = vsub.f32 1.0, %v1164
    %v1166 = vmul.f32 %v1163, %v1165
    %v1167 = vadd.f32 %v1163, %v1166
    %vm1168 = vweird.f32 %v1162
    %vm1169 = vweird.f32 %v1163
    %vm1170 = vmor %vm1168, %vm1169
    %v1171 = vsel %vm1170, %v1163, %v1167
    %v1172 = vand.u32 2147483647, %v1162
    %vm1173 = vcmp.eq.f32.partialorder %v1172, 8.507059e+37
    %v1174 = vand.u32 %v1162, 2147483648
    %v1175 = vor.u32 1.1754944e-38, %v1174
    %v1176 = vsel %vm1173, %v1175, %v1171
    %v1177 = vmul.f32 1.0, %v1176
    %v1178 = vtanh.pop %v1158
    %v1180 = vrot.slane %v1040, 6
    %v1182 = vmul.f32 %v1177, %v1180
    %1184 = vrot.lane.b32.xlu0 %v1178, 64
    %v1185 = vpop.permute.xlu0 %1184
    %v1187 = vmul.f32 %v1177, %v1185
    %1189 = vrot.lane.b32.xlu0 %v1187, 32
    %v1190 = vpop.permute.xlu0 %1189
    %v1192 = vadd.f32 %v1182, %v1190
    %v1193 = vtanh.pop %v1192
    %1195 = vrot.lane.b32.xlu0 %v1193, 64
    %v1196 = vpop.permute.xlu0 %1195
    %v1198 = vmul.f32 %v1177, %v1196
    %1200 = vrot.lane.b32.xlu0 %v1198, 32
    %v1201 = vpop.permute.xlu0 %1200
    %1203 = vst.msk [vmem:[#allocation3] sm:$0x30] %vm1127, %v1201
    %v1204 = vld [vmem:[#allocation2 + $0x18] sm:$0xc]
    %v1205 = vrot.slane %v1122, 4
    %1206 = vrot.lane.b32.xlu0 %v1205, 32
    %v1207 = vpop.permute.xlu0 %1206
    %v1208 = vsel %vm832, %v1207, 0
    %1210 = vmatpush.msra.mxu0 0.0
    %1211 = vmatpush.msra.mxu0 0.0
    %1212 = vmatpush.msra.mxu0 0.0
    %1213 = vmatpush.msra.mxu0 0.0
    %1214 = vmatpush.msra.mxu0 0.0
    %1215 = vmatpush.msra.mxu0 0.0
    %1216 = vmatpush.msra.mxu0 0.0
    %1217 = vmatpush.msra.mxu0 0.0
    %1218 = vmatpush.msra.mxu0 0.0
    %1219 = vmatpush.msra.mxu0 0.0
    %1220 = vmatpush.msra.mxu0 0.0
    %1221 = vmatpush.msra.mxu0 0.0
    %1222 = vmatpush.msra.mxu0 %v824
    %1223 = vmatpush.msra.mxu0 %v823
    %1224 = vmatpush.msra.mxu0 %v822
    %1225 = vmatpush.msra.mxu0 %v821
    %1226 = vmatmul.f32.gmra.mxu0 %v1208
    %v1227 = vpop.f32.mrf.mxu0
    %v1228 = vadd.f32 0.0, %v1227
    %1229 = vdwg.mxu0
    %v1231 = vrot.slane %v1228, 6
    %v1233 = vadd.f32 %v1204, %v1231
    %v1234 = vxor.u32 %v1233, 2147483648
    %v1235 = vmul.f32 %v1234, 1.442695
    %v1236 = vpow.pop %v1235
    %v1237 = vadd.f32 %v1236, 1.0
    %v1238 = vrcp.pop %v1237
    %v1239 = vmul.f32 %v1237, %v1238
    %v1240 = vsub.f32 1.0, %v1239
    %v1241 = vmul.f32 %v1238, %v1240
    %v1242 = vadd.f32 %v1238, %v1241
    %vm1243 = vweird.f32 %v1237
    %vm1244 = vweird.f32 %v1238
    %vm1245 = vmor %vm1243, %vm1244
    %v1246 = vsel %vm1245, %v1238, %v1242
    %v1247 = vand.u32 2147483647, %v1237
    %vm1248 = vcmp.eq.f32.partialorder %v1247, 8.507059e+37
    %v1249 = vand.u32 %v1237, 2147483648
    %v1250 = vor.u32 1.1754944e-38, %v1249
    %v1251 = vsel %vm1248, %v1250, %v1246
    %v1252 = vmul.f32 1.0, %v1251
    %v1253 = vtanh.pop %v1233
    %v1255 = vrot.slane %v1116, 2
    %v1257 = vmul.f32 %v1252, %v1255
    %1259 = vrot.lane.b32.xlu0 %v1253, 64
    %v1260 = vpop.permute.xlu0 %1259
    %v1262 = vmul.f32 %v1252, %v1260
    %1264 = vrot.lane.b32.xlu0 %v1262, 32
    %v1265 = vpop.permute.xlu0 %1264
    %v1267 = vadd.f32 %v1257, %v1265
    %v1268 = vtanh.pop %v1267
    %1270 = vrot.lane.b32.xlu0 %v1268, 64
    %v1271 = vpop.permute.xlu0 %1270
    %v1273 = vmul.f32 %v1252, %v1271
    %1275 = vrot.lane.b32.xlu0 %v1273, 32
    %v1276 = vpop.permute.xlu0 %1275
    %1278 = vst.msk [vmem:[#allocation4 + $0x8] sm:$0xc] %vm1051, %v1276
    %v1279 = vld [vmem:[#allocation2] sm:$0xc0]
    %v1280 = vrot.slane %v1198, 4
    %1281 = vrot.lane.b32.xlu0 %v1280, 32
    %v1282 = vpop.permute.xlu0 %1281
    %v1283 = vsel %vm832, %v1282, 0
    %1285 = vmatpush.msra.mxu0 0.0
    %1286 = vmatpush.msra.mxu0 0.0
    %1287 = vmatpush.msra.mxu0 0.0
    %1288 = vmatpush.msra.mxu0 0.0
    %1289 = vmatpush.msra.mxu0 0.0
    %1290 = vmatpush.msra.mxu0 0.0
    %1291 = vmatpush.msra.mxu0 0.0
    %1292 = vmatpush.msra.mxu0 0.0
    %1293 = vmatpush.msra.mxu0 0.0
    %1294 = vmatpush.msra.mxu0 0.0
    %1295 = vmatpush.msra.mxu0 0.0
    %1296 = vmatpush.msra.mxu0 0.0
    %1297 = vmatpush.msra.mxu0 %v820
    %1298 = vmatpush.msra.mxu0 %v819
    %1299 = vmatpush.msra.mxu0 %v818
    %1300 = vmatpush.msra.mxu0 %v817
    %1301 = vmatmul.f32.gmra.mxu0 %v1283
    %v1302 = vpop.f32.mrf.mxu0
    %v1303 = vadd.f32 0.0, %v1302
    %1304 = vdwg.mxu0
    %v1306 = vrot.slane %v1303, 2
    %v1308 = vadd.f32 %v1279, %v1306
    %v1309 = vxor.u32 %v1308, 2147483648
    %v1310 = vmul.f32 %v1309, 1.442695
    %v1311 = vpow.pop %v1310
    %v1312 = vadd.f32 %v1311, 1.0
    %v1313 = vrcp.pop %v1312
    %v1314 = vmul.f32 %v1312, %v1313
    %v1315 = vsub.f32 1.0, %v1314
    %v1316 = vmul.f32 %v1313, %v1315
    %v1317 = vadd.f32 %v1313, %v1316
    %vm1318 = vweird.f32 %v1312
    %vm1319 = vweird.f32 %v1313
    %vm1320 = vmor %vm1318, %vm1319
    %v1321 = vsel %vm1320, %v1313, %v1317
    %v1322 = vand.u32 2147483647, %v1312
    %vm1323 = vcmp.eq.f32.partialorder %v1322, 8.507059e+37
    %v1324 = vand.u32 %v1312, 2147483648
    %v1325 = vor.u32 1.1754944e-38, %v1324
    %v1326 = vsel %vm1323, %v1325, %v1321
    %v1327 = vmul.f32 1.0, %v1326
    %v1328 = vtanh.pop %v1308
    %v1330 = vrot.slane %v1192, 6
    %v1332 = vmul.f32 %v1327, %v1330
    %1334 = vrot.lane.b32.xlu0 %v1328, 64
    %v1335 = vpop.permute.xlu0 %1334
    %v1337 = vmul.f32 %v1327, %v1335
    %1339 = vrot.lane.b32.xlu0 %v1337, 32
    %v1340 = vpop.permute.xlu0 %1339
    %v1342 = vadd.f32 %v1332, %v1340
    %v1343 = vtanh.pop %v1342
    %1345 = vrot.lane.b32.xlu0 %v1343, 64
    %v1346 = vpop.permute.xlu0 %1345
    %v1348 = vmul.f32 %v1327, %v1346
    %1350 = vrot.lane.b32.xlu0 %v1348, 32
    %v1351 = vpop.permute.xlu0 %1350
    %1353 = vst.msk [vmem:[#allocation3] sm:$0xc0] %vm978, %v1351
    %v1354 = vld [vmem:[#allocation2 + $0x18] sm:$0x3]
    %v1355 = vrot.slane %v1273, 2
    %1356 = vrot.lane.b32.xlu0 %v1355, 32
    %v1357 = vpop.permute.xlu0 %1356
    %v1358 = vsel %vm832, %v1357, 0
    %1360 = vmatpush.msra.mxu0 0.0
    %1361 = vmatpush.msra.mxu0 0.0
    %1362 = vmatpush.msra.mxu0 0.0
    %1363 = vmatpush.msra.mxu0 0.0
    %1364 = vmatpush.msra.mxu0 0.0
    %1365 = vmatpush.msra.mxu0 0.0
    %1366 = vmatpush.msra.mxu0 0.0
    %1367 = vmatpush.msra.mxu0 0.0
    %1368 = vmatpush.msra.mxu0 0.0
    %1369 = vmatpush.msra.mxu0 0.0
    %1370 = vmatpush.msra.mxu0 0.0
    %1371 = vmatpush.msra.mxu0 0.0
    %1372 = vmatpush.msra.mxu0 %v824
    %1373 = vmatpush.msra.mxu0 %v823
    %1374 = vmatpush.msra.mxu0 %v822
    %1375 = vmatpush.msra.mxu0 %v821
    %1376 = vmatmul.f32.gmra.mxu0 %v1358
    %v1377 = vpop.f32.mrf.mxu0
    %v1378 = vadd.f32 0.0, %v1377
    %1379 = vdwg.mxu0
    %v1380 = vadd.f32 %v1354, %v1378
    %v1381 = vxor.u32 %v1380, 2147483648
    %v1382 = vmul.f32 %v1381, 1.442695
    %v1383 = vpow.pop %v1382
    %v1384 = vadd.f32 %v1383, 1.0
    %v1385 = vrcp.pop %v1384
    %v1386 = vmul.f32 %v1384, %v1385
    %v1387 = vsub.f32 1.0, %v1386
    %v1388 = vmul.f32 %v1385, %v1387
    %v1389 = vadd.f32 %v1385, %v1388
    %vm1390 = vweird.f32 %v1384
    %vm1391 = vweird.f32 %v1385
    %vm1392 = vmor %vm1390, %vm1391
    %v1393 = vsel %vm1392, %v1385, %v1389
    %v1394 = vand.u32 2147483647, %v1384
    %vm1395 = vcmp.eq.f32.partialorder %v1394, 8.507059e+37
    %v1396 = vand.u32 %v1384, 2147483648
    %v1397 = vor.u32 1.1754944e-38, %v1396
    %v1398 = vsel %vm1395, %v1397, %v1393
    %v1399 = vmul.f32 1.0, %v1398
    %v1400 = vtanh.pop %v1380
    %v1402 = vrot.slane %v1267, 2
    %v1404 = vmul.f32 %v1399, %v1402
    %1406 = vrot.lane.b32.xlu0 %v1400, 64
    %v1407 = vpop.permute.xlu0 %1406
    %v1409 = vmul.f32 %v1399, %v1407
    %1411 = vrot.lane.b32.xlu0 %v1409, 32
    %v1412 = vpop.permute.xlu0 %1411
    %v1414 = vadd.f32 %v1404, %v1412
    %v1415 = vtanh.pop %v1414
    %1417 = vrot.lane.b32.xlu0 %v1415, 64
    %v1418 = vpop.permute.xlu0 %1417
    %v1420 = vmul.f32 %v1399, %v1418
    %1422 = vrot.lane.b32.xlu0 %v1420, 32
    %v1423 = vpop.permute.xlu0 %1422
    %1425 = vst.msk [vmem:[#allocation4 + $0x8] sm:$0x3] %vm902, %v1423
    %v1426 = vld [vmem:[#allocation2 + $0x10] sm:$0x3]
    %v1427 = vrot.slane %v1348, 6
    %1428 = vrot.lane.b32.xlu0 %v1427, 32
    %v1429 = vpop.permute.xlu0 %1428
    %v1430 = vsel %vm832, %v1429, 0
    %1432 = vmatpush.msra.mxu0 0.0
    %1433 = vmatpush.msra.mxu0 0.0
    %1434 = vmatpush.msra.mxu0 0.0
    %1435 = vmatpush.msra.mxu0 0.0
    %1436 = vmatpush.msra.mxu0 0.0
    %1437 = vmatpush.msra.mxu0 0.0
    %1438 = vmatpush.msra.mxu0 0.0
    %1439 = vmatpush.msra.mxu0 0.0
    %1440 = vmatpush.msra.mxu0 0.0
    %1441 = vmatpush.msra.mxu0 0.0
    %1442 = vmatpush.msra.mxu0 0.0
    %1443 = vmatpush.msra.mxu0 0.0
    %1444 = vmatpush.msra.mxu0 %v820
    %1445 = vmatpush.msra.mxu0 %v819
    %1446 = vmatpush.msra.mxu0 %v818
    %1447 = vmatpush.msra.mxu0 %v817
    %1448 = vmatmul.f32.gmra.mxu0 %v1430
    %v1449 = vpop.f32.mrf.mxu0
    %v1450 = vadd.f32 0.0, %v1449
    %1451 = vdwg.mxu0
    %v1452 = vadd.f32 %v1426, %v1450
    %v1453 = vxor.u32 %v1452, 2147483648
    %v1454 = vmul.f32 %v1453, 1.442695
    %v1455 = vpow.pop %v1454
    %v1456 = vadd.f32 %v1455, 1.0
    %v1457 = vrcp.pop %v1456
    %v1458 = vmul.f32 %v1456, %v1457
    %v1459 = vsub.f32 1.0, %v1458
    %v1460 = vmul.f32 %v1457, %v1459
    %v1461 = vadd.f32 %v1457, %v1460
    %vm1462 = vweird.f32 %v1456
    %vm1463 = vweird.f32 %v1457
    %vm1464 = vmor %vm1462, %vm1463
    %v1465 = vsel %vm1464, %v1457, %v1461
    %v1466 = vand.u32 2147483647, %v1456
    %vm1467 = vcmp.eq.f32.partialorder %v1466, 8.507059e+37
    %v1468 = vand.u32 %v1456, 2147483648
    %v1469 = vor.u32 1.1754944e-38, %v1468
    %v1470 = vsel %vm1467, %v1469, %v1465
    %v1471 = vmul.f32 1.0, %v1470
    %v1472 = vtanh.pop %v1452
    %v1474 = vrot.slane %v1342, 6
    %v1476 = vmul.f32 %v1471, %v1474
    %1478 = vrot.lane.b32.xlu0 %v1472, 64
    %v1479 = vpop.permute.xlu0 %1478
    %v1481 = vmul.f32 %v1471, %v1479
    %1483 = vrot.lane.b32.xlu0 %v1481, 32
    %v1484 = vpop.permute.xlu0 %1483
    %v1486 = vadd.f32 %v1476, %v1484
    %v1487 = vtanh.pop %v1486
    %1489 = vrot.lane.b32.xlu0 %v1487, 64
    %v1490 = vpop.permute.xlu0 %1489
    %v1492 = vmul.f32 %v1471, %v1490
    %1494 = vrot.lane.b32.xlu0 %v1492, 32
    %v1495 = vpop.permute.xlu0 %1494
    %1497 = vst.msk [vmem:[#allocation3 + $0x8] sm:$0x3] %vm902, %v1495
    %v1498 = vld [vmem:[#allocation2 + $0x8] sm:$0xc0]
    %v1499 = vsel %vm832, %v1423, 0
    %1501 = vmatpush.msra.mxu0 0.0
    %1502 = vmatpush.msra.mxu0 0.0
    %1503 = vmatpush.msra.mxu0 0.0
    %1504 = vmatpush.msra.mxu0 0.0
    %1505 = vmatpush.msra.mxu0 0.0
    %1506 = vmatpush.msra.mxu0 0.0
    %1507 = vmatpush.msra.mxu0 0.0
    %1508 = vmatpush.msra.mxu0 0.0
    %1509 = vmatpush.msra.mxu0 0.0
    %1510 = vmatpush.msra.mxu0 0.0
    %1511 = vmatpush.msra.mxu0 0.0
    %1512 = vmatpush.msra.mxu0 0.0
    %1513 = vmatpush.msra.mxu0 %v824
    %1514 = vmatpush.msra.mxu0 %v823
    %1515 = vmatpush.msra.mxu0 %v822
    %1516 = vmatpush.msra.mxu0 %v821
    %1517 = vmatmul.f32.gmra.mxu0 %v1499
    %v1518 = vpop.f32.mrf.mxu0
    %v1519 = vadd.f32 0.0, %v1518
    %1520 = vdwg.mxu0
    %v1522 = vrot.slane %v1519, 2
    %v1524 = vadd.f32 %v1498, %v1522
    %v1525 = vxor.u32 %v1524, 2147483648
    %v1526 = vmul.f32 %v1525, 1.442695
    %v1527 = vpow.pop %v1526
    %v1528 = vadd.f32 %v1527, 1.0
    %v1529 = vrcp.pop %v1528
    %v1530 = vmul.f32 %v1528, %v1529
    %v1531 = vsub.f32 1.0, %v1530
    %v1532 = vmul.f32 %v1529, %v1531
    %v1533 = vadd.f32 %v1529, %v1532
    %vm1534 = vweird.f32 %v1528
    %vm1535 = vweird.f32 %v1529
    %vm1536 = vmor %vm1534, %vm1535
    %v1537 = vsel %vm1536, %v1529, %v1533
    %v1538 = vand.u32 2147483647, %v1528
    %vm1539 = vcmp.eq.f32.partialorder %v1538, 8.507059e+37
    %v1540 = vand.u32 %v1528, 2147483648
    %v1541 = vor.u32 1.1754944e-38, %v1540
    %v1542 = vsel %vm1539, %v1541, %v1537
    %v1543 = vmul.f32 1.0, %v1542
    %v1544 = vtanh.pop %v1524
    %v1546 = vrot.slane %v1414, 2
    %v1548 = vmul.f32 %v1543, %v1546
    %1550 = vrot.lane.b32.xlu0 %v1544, 64
    %v1551 = vpop.permute.xlu0 %1550
    %v1553 = vmul.f32 %v1543, %v1551
    %1555 = vrot.lane.b32.xlu0 %v1553, 32
    %v1556 = vpop.permute.xlu0 %1555
    %v1558 = vadd.f32 %v1548, %v1556
    %v1559 = vtanh.pop %v1558
    %1561 = vrot.lane.b32.xlu0 %v1559, 64
    %v1562 = vpop.permute.xlu0 %1561
    %v1564 = vmul.f32 %v1543, %v1562
    %1566 = vrot.lane.b32.xlu0 %v1564, 32
    %v1567 = vpop.permute.xlu0 %1566
    %1569 = vst.msk [vmem:[#allocation4] sm:$0xc0] %vm978, %v1567
    %v1570 = vld [vmem:[#allocation2 + $0x10] sm:$0xc]
    %v1571 = vsel %vm832, %v1495, 0
    %1573 = vmatpush.msra.mxu0 0.0
    %1574 = vmatpush.msra.mxu0 0.0
    %1575 = vmatpush.msra.mxu0 0.0
    %1576 = vmatpush.msra.mxu0 0.0
    %1577 = vmatpush.msra.mxu0 0.0
    %1578 = vmatpush.msra.mxu0 0.0
    %1579 = vmatpush.msra.mxu0 0.0
    %1580 = vmatpush.msra.mxu0 0.0
    %1581 = vmatpush.msra.mxu0 0.0
    %1582 = vmatpush.msra.mxu0 0.0
    %1583 = vmatpush.msra.mxu0 0.0
    %1584 = vmatpush.msra.mxu0 0.0
    %1585 = vmatpush.msra.mxu0 %v820
    %1586 = vmatpush.msra.mxu0 %v819
    %1587 = vmatpush.msra.mxu0 %v818
    %1588 = vmatpush.msra.mxu0 %v817
    %1589 = vmatmul.f32.gmra.mxu0 %v1571
    %v1590 = vpop.f32.mrf.mxu0
    %v1591 = vadd.f32 0.0, %v1590
    %1592 = vdwg.mxu0
    %v1594 = vrot.slane %v1591, 6
    %v1596 = vadd.f32 %v1570, %v1594
    %v1597 = vxor.u32 %v1596, 2147483648
    %v1598 = vmul.f32 %v1597, 1.442695
    %v1599 = vpow.pop %v1598
    %v1600 = vadd.f32 %v1599, 1.0
    %v1601 = vrcp.pop %v1600
    %v1602 = vmul.f32 %v1600, %v1601
    %v1603 = vsub.f32 1.0, %v1602
    %v1604 = vmul.f32 %v1601, %v1603
    %v1605 = vadd.f32 %v1601, %v1604
    %vm1606 = vweird.f32 %v1600
    %vm1607 = vweird.f32 %v1601
    %vm1608 = vmor %vm1606, %vm1607
    %v1609 = vsel %vm1608, %v1601, %v1605
    %v1610 = vand.u32 2147483647, %v1600
    %vm1611 = vcmp.eq.f32.partialorder %v1610, 8.507059e+37
    %v1612 = vand.u32 %v1600, 2147483648
    %v1613 = vor.u32 1.1754944e-38, %v1612
    %v1614 = vsel %vm1611, %v1613, %v1609
    %v1615 = vmul.f32 1.0, %v1614
    %v1616 = vtanh.pop %v1596
    %v1618 = vrot.slane %v1486, 6
    %v1620 = vmul.f32 %v1615, %v1618
    %1622 = vrot.lane.b32.xlu0 %v1616, 64
    %v1623 = vpop.permute.xlu0 %1622
    %v1625 = vmul.f32 %v1615, %v1623
    %1627 = vrot.lane.b32.xlu0 %v1625, 32
    %v1628 = vpop.permute.xlu0 %1627
    %v1630 = vadd.f32 %v1620, %v1628
    %v1631 = vtanh.pop %v1630
    %1633 = vrot.lane.b32.xlu0 %v1631, 64
    %v1634 = vpop.permute.xlu0 %1633
    %v1636 = vmul.f32 %v1615, %v1634
    %1638 = vrot.lane.b32.xlu0 %v1636, 32
    %v1639 = vpop.permute.xlu0 %1638
    %1641 = vst.msk [vmem:[#allocation3 + $0x8] sm:$0xc] %vm1051, %v1639
    %v1642 = vld [vmem:[#allocation2 + $0x8] sm:$0x30]
    %v1643 = vrot.slane %v1564, 6
    %1644 = vrot.lane.b32.xlu0 %v1643, 32
    %v1645 = vpop.permute.xlu0 %1644
    %v1646 = vsel %vm832, %v1645, 0
    %1648 = vmatpush.msra.mxu0 0.0
    %1649 = vmatpush.msra.mxu0 0.0
    %1650 = vmatpush.msra.mxu0 0.0
    %1651 = vmatpush.msra.mxu0 0.0
    %1652 = vmatpush.msra.mxu0 0.0
    %1653 = vmatpush.msra.mxu0 0.0
    %1654 = vmatpush.msra.mxu0 0.0
    %1655 = vmatpush.msra.mxu0 0.0
    %1656 = vmatpush.msra.mxu0 0.0
    %1657 = vmatpush.msra.mxu0 0.0
    %1658 = vmatpush.msra.mxu0 0.0
    %1659 = vmatpush.msra.mxu0 0.0
    %1660 = vmatpush.msra.mxu0 %v824
    %1661 = vmatpush.msra.mxu0 %v823
    %1662 = vmatpush.msra.mxu0 %v822
    %1663 = vmatpush.msra.mxu0 %v821
    %1664 = vmatmul.f32.gmra.mxu0 %v1646
    %v1665 = vpop.f32.mrf.mxu0
    %v1666 = vadd.f32 0.0, %v1665
    %1667 = vdwg.mxu0
    %v1669 = vrot.slane %v1666, 4
    %v1671 = vadd.f32 %v1642, %v1669
    %v1672 = vxor.u32 %v1671, 2147483648
    %v1673 = vmul.f32 %v1672, 1.442695
    %v1674 = vpow.pop %v1673
    %v1675 = vadd.f32 %v1674, 1.0
    %v1676 = vrcp.pop %v1675
    %v1677 = vmul.f32 %v1675, %v1676
    %v1678 = vsub.f32 1.0, %v1677
    %v1679 = vmul.f32 %v1676, %v1678
    %v1680 = vadd.f32 %v1676, %v1679
    %vm1681 = vweird.f32 %v1675
    %vm1682 = vweird.f32 %v1676
    %vm1683 = vmor %vm1681, %vm1682
    %v1684 = vsel %vm1683, %v1676, %v1680
    %v1685 = vand.u32 2147483647, %v1675
    %vm1686 = vcmp.eq.f32.partialorder %v1685, 8.507059e+37
    %v1687 = vand.u32 %v1675, 2147483648
    %v1688 = vor.u32 1.1754944e-38, %v1687
    %v1689 = vsel %vm1686, %v1688, %v1684
    %v1690 = vmul.f32 1.0, %v1689
    %v1691 = vtanh.pop %v1671
    %v1693 = vrot.slane %v1558, 2
    %v1695 = vmul.f32 %v1690, %v1693
    %1697 = vrot.lane.b32.xlu0 %v1691, 64
    %v1698 = vpop.permute.xlu0 %1697
    %v1700 = vmul.f32 %v1690, %v1698
    %1702 = vrot.lane.b32.xlu0 %v1700, 32
    %v1703 = vpop.permute.xlu0 %1702
    %v1705 = vadd.f32 %v1695, %v1703
    %v1706 = vtanh.pop %v1705
    %1708 = vrot.lane.b32.xlu0 %v1706, 64
    %v1709 = vpop.permute.xlu0 %1708
    %v1711 = vmul.f32 %v1690, %v1709
    %1713 = vrot.lane.b32.xlu0 %v1711, 32
    %v1714 = vpop.permute.xlu0 %1713
    %1716 = vst.msk [vmem:[#allocation4] sm:$0x30] %vm1127, %v1714
    %v1717 = vld [vmem:[#allocation2 + $0x10] sm:$0x30]
    %v1718 = vrot.slane %v1636, 2
    %1719 = vrot.lane.b32.xlu0 %v1718, 32
    %v1720 = vpop.permute.xlu0 %1719
    %v1721 = vsel %vm832, %v1720, 0
    %1723 = vmatpush.msra.mxu0 0.0
    %1724 = vmatpush.msra.mxu0 0.0
    %1725 = vmatpush.msra.mxu0 0.0
    %1726 = vmatpush.msra.mxu0 0.0
    %1727 = vmatpush.msra.mxu0 0.0
    %1728 = vmatpush.msra.mxu0 0.0
    %1729 = vmatpush.msra.mxu0 0.0
    %1730 = vmatpush.msra.mxu0 0.0
    %1731 = vmatpush.msra.mxu0 0.0
    %1732 = vmatpush.msra.mxu0 0.0
    %1733 = vmatpush.msra.mxu0 0.0
    %1734 = vmatpush.msra.mxu0 0.0
    %1735 = vmatpush.msra.mxu0 %v820
    %1736 = vmatpush.msra.mxu0 %v819
    %1737 = vmatpush.msra.mxu0 %v818
    %1738 = vmatpush.msra.mxu0 %v817
    %1739 = vmatmul.f32.gmra.mxu0 %v1721
    %v1740 = vpop.f32.mrf.mxu0
    %v1741 = vadd.f32 0.0, %v1740
    %1742 = vdwg.mxu0
    %v1744 = vrot.slane %v1741, 4
    %v1746 = vadd.f32 %v1717, %v1744
    %v1747 = vxor.u32 %v1746, 2147483648
    %v1748 = vmul.f32 %v1747, 1.442695
    %v1749 = vpow.pop %v1748
    %v1750 = vadd.f32 %v1749, 1.0
    %v1751 = vrcp.pop %v1750
    %v1752 = vmul.f32 %v1750, %v1751
    %v1753 = vsub.f32 1.0, %v1752
    %v1754 = vmul.f32 %v1751, %v1753
    %v1755 = vadd.f32 %v1751, %v1754
    %vm1756 = vweird.f32 %v1750
    %vm1757 = vweird.f32 %v1751
    %vm1758 = vmor %vm1756, %vm1757
    %v1759 = vsel %vm1758, %v1751, %v1755
    %v1760 = vand.u32 2147483647, %v1750
    %vm1761 = vcmp.eq.f32.partialorder %v1760, 8.507059e+37
    %v1762 = vand.u32 %v1750, 2147483648
    %v1763 = vor.u32 1.1754944e-38, %v1762
    %v1764 = vsel %vm1761, %v1763, %v1759
    %v1765 = vmul.f32 1.0, %v1764
    %v1766 = vtanh.pop %v1746
    %v1768 = vrot.slane %v1630, 6
    %v1770 = vmul.f32 %v1765, %v1768
    %1772 = vrot.lane.b32.xlu0 %v1766, 64
    %v1773 = vpop.permute.xlu0 %1772
    %v1775 = vmul.f32 %v1765, %v1773
    %1777 = vrot.lane.b32.xlu0 %v1775, 32
    %v1778 = vpop.permute.xlu0 %1777
    %v1780 = vadd.f32 %v1770, %v1778
    %v1781 = vtanh.pop %v1780
    %1783 = vrot.lane.b32.xlu0 %v1781, 64
    %v1784 = vpop.permute.xlu0 %1783
    %v1786 = vmul.f32 %v1765, %v1784
    %1788 = vrot.lane.b32.xlu0 %v1786, 32
    %v1789 = vpop.permute.xlu0 %1788
    %1791 = vst.msk [vmem:[#allocation3 + $0x8] sm:$0x30] %vm1127, %v1789
    %v1792 = vld [vmem:[#allocation2 + $0x8] sm:$0xc]
    %v1793 = vrot.slane %v1711, 4
    %1794 = vrot.lane.b32.xlu0 %v1793, 32
    %v1795 = vpop.permute.xlu0 %1794
    %v1796 = vsel %vm832, %v1795, 0
    %1798 = vmatpush.msra.mxu0 0.0
    %1799 = vmatpush.msra.mxu0 0.0
    %1800 = vmatpush.msra.mxu0 0.0
    %1801 = vmatpush.msra.mxu0 0.0
    %1802 = vmatpush.msra.mxu0 0.0
    %1803 = vmatpush.msra.mxu0 0.0
    %1804 = vmatpush.msra.mxu0 0.0
    %1805 = vmatpush.msra.mxu0 0.0
    %1806 = vmatpush.msra.mxu0 0.0
    %1807 = vmatpush.msra.mxu0 0.0
    %1808 = vmatpush.msra.mxu0 0.0
    %1809 = vmatpush.msra.mxu0 0.0
    %1810 = vmatpush.msra.mxu0 %v824
    %1811 = vmatpush.msra.mxu0 %v823
    %1812 = vmatpush.msra.mxu0 %v822
    %1813 = vmatpush.msra.mxu0 %v821
    %1814 = vmatmul.f32.gmra.mxu0 %v1796
    %v1815 = vpop.f32.mrf.mxu0
    %v1816 = vadd.f32 0.0, %v1815
    %1817 = vdwg.mxu0
    %v1819 = vrot.slane %v1816, 6
    %v1821 = vadd.f32 %v1792, %v1819
    %v1822 = vxor.u32 %v1821, 2147483648
    %v1823 = vmul.f32 %v1822, 1.442695
    %v1824 = vpow.pop %v1823
    %v1825 = vadd.f32 %v1824, 1.0
    %v1826 = vrcp.pop %v1825
    %v1827 = vmul.f32 %v1825, %v1826
    %v1828 = vsub.f32 1.0, %v1827
    %v1829 = vmul.f32 %v1826, %v1828
    %v1830 = vadd.f32 %v1826, %v1829
    %vm1831 = vweird.f32 %v1825
    %vm1832 = vweird.f32 %v1826
    %vm1833 = vmor %vm1831, %vm1832
    %v1834 = vsel %vm1833, %v1826, %v1830
    %v1835 = vand.u32 2147483647, %v1825
    %vm1836 = vcmp.eq.f32.partialorder %v1835, 8.507059e+37
    %v1837 = vand.u32 %v1825, 2147483648
    %v1838 = vor.u32 1.1754944e-38, %v1837
    %v1839 = vsel %vm1836, %v1838, %v1834
    %v1840 = vmul.f32 1.0, %v1839
    %v1841 = vtanh.pop %v1821
    %v1843 = vrot.slane %v1705, 2
    %v1845 = vmul.f32 %v1840, %v1843
    %1847 = vrot.lane.b32.xlu0 %v1841, 64
    %v1848 = vpop.permute.xlu0 %1847
    %v1850 = vmul.f32 %v1840, %v1848
    %1852 = vrot.lane.b32.xlu0 %v1850, 32
    %v1853 = vpop.permute.xlu0 %1852
    %v1855 = vadd.f32 %v1845, %v1853
    %v1856 = vtanh.pop %v1855
    %1858 = vrot.lane.b32.xlu0 %v1856, 64
    %v1859 = vpop.permute.xlu0 %1858
    %v1861 = vmul.f32 %v1840, %v1859
    %1863 = vrot.lane.b32.xlu0 %v1861, 32
    %v1864 = vpop.permute.xlu0 %1863
    %1866 = vst.msk [vmem:[#allocation4] sm:$0xc] %vm1051, %v1864
    %v1867 = vld [vmem:[#allocation2 + $0x10] sm:$0xc0]
    %v1868 = vrot.slane %v1786, 4
    %1869 = vrot.lane.b32.xlu0 %v1868, 32
    %v1870 = vpop.permute.xlu0 %1869
    %v1871 = vsel %vm832, %v1870, 0
    %1873 = vmatpush.msra.mxu0 0.0
    %1874 = vmatpush.msra.mxu0 0.0
    %1875 = vmatpush.msra.mxu0 0.0
    %1876 = vmatpush.msra.mxu0 0.0
    %1877 = vmatpush.msra.mxu0 0.0
    %1878 = vmatpush.msra.mxu0 0.0
    %1879 = vmatpush.msra.mxu0 0.0
    %1880 = vmatpush.msra.mxu0 0.0
    %1881 = vmatpush.msra.mxu0 0.0
    %1882 = vmatpush.msra.mxu0 0.0
    %1883 = vmatpush.msra.mxu0 0.0
    %1884 = vmatpush.msra.mxu0 0.0
    %1885 = vmatpush.msra.mxu0 %v820
    %1886 = vmatpush.msra.mxu0 %v819
    %1887 = vmatpush.msra.mxu0 %v818
    %1888 = vmatpush.msra.mxu0 %v817
    %1889 = vmatmul.f32.gmra.mxu0 %v1871
    %v1890 = vpop.f32.mrf.mxu0
    %v1891 = vadd.f32 0.0, %v1890
    %1892 = vdwg.mxu0
    %v1894 = vrot.slane %v1891, 2
    %v1896 = vadd.f32 %v1867, %v1894
    %v1897 = vxor.u32 %v1896, 2147483648
    %v1898 = vmul.f32 %v1897, 1.442695
    %v1899 = vpow.pop %v1898
    %v1900 = vadd.f32 %v1899, 1.0
    %v1901 = vrcp.pop %v1900
    %v1902 = vmul.f32 %v1900, %v1901
    %v1903 = vsub.f32 1.0, %v1902
    %v1904 = vmul.f32 %v1901, %v1903
    %v1905 = vadd.f32 %v1901, %v1904
    %vm1906 = vweird.f32 %v1900
    %vm1907 = vweird.f32 %v1901
    %vm1908 = vmor %vm1906, %vm1907
    %v1909 = vsel %vm1908, %v1901, %v1905
    %v1910 = vand.u32 2147483647, %v1900
    %vm1911 = vcmp.eq.f32.partialorder %v1910, 8.507059e+37
    %v1912 = vand.u32 %v1900, 2147483648
    %v1913 = vor.u32 1.1754944e-38, %v1912
    %v1914 = vsel %vm1911, %v1913, %v1909
    %v1915 = vmul.f32 1.0, %v1914
    %v1916 = vtanh.pop %v1896
    %v1918 = vrot.slane %v1780, 6
    %v1920 = vmul.f32 %v1915, %v1918
    %1922 = vrot.lane.b32.xlu0 %v1916, 64
    %v1923 = vpop.permute.xlu0 %1922
    %v1925 = vmul.f32 %v1915, %v1923
    %1927 = vrot.lane.b32.xlu0 %v1925, 32
    %v1928 = vpop.permute.xlu0 %1927
    %v1930 = vadd.f32 %v1920, %v1928
    %v1931 = vtanh.pop %v1930
    %1933 = vrot.lane.b32.xlu0 %v1931, 64
    %v1934 = vpop.permute.xlu0 %1933
    %v1936 = vmul.f32 %v1915, %v1934
    %1938 = vrot.lane.b32.xlu0 %v1936, 32
    %v1939 = vpop.permute.xlu0 %1938
    %1941 = vst.msk [vmem:[#allocation3 + $0x8] sm:$0xc0] %vm978, %v1939
    %v1942 = vld [vmem:[#allocation2 + $0x8] sm:$0x3]
    %v1943 = vrot.slane %v1861, 2
    %1944 = vrot.lane.b32.xlu0 %v1943, 32
    %v1945 = vpop.permute.xlu0 %1944
    %v1946 = vsel %vm832, %v1945, 0
    %1948 = vmatpush.msra.mxu0 0.0
    %1949 = vmatpush.msra.mxu0 0.0
    %1950 = vmatpush.msra.mxu0 0.0
    %1951 = vmatpush.msra.mxu0 0.0
    %1952 = vmatpush.msra.mxu0 0.0
    %1953 = vmatpush.msra.mxu0 0.0
    %1954 = vmatpush.msra.mxu0 0.0
    %1955 = vmatpush.msra.mxu0 0.0
    %1956 = vmatpush.msra.mxu0 0.0
    %1957 = vmatpush.msra.mxu0 0.0
    %1958 = vmatpush.msra.mxu0 0.0
    %1959 = vmatpush.msra.mxu0 0.0
    %1960 = vmatpush.msra.mxu0 %v824
    %1961 = vmatpush.msra.mxu0 %v823
    %1962 = vmatpush.msra.mxu0 %v822
    %1963 = vmatpush.msra.mxu0 %v821
    %1964 = vmatmul.f32.gmra.mxu0 %v1946
    %v1965 = vpop.f32.mrf.mxu0
    %v1966 = vadd.f32 0.0, %v1965
    %1967 = vdwg.mxu0
    %v1968 = vadd.f32 %v1942, %v1966
    %v1969 = vxor.u32 %v1968, 2147483648
    %v1970 = vmul.f32 %v1969, 1.442695
    %v1971 = vpow.pop %v1970
    %v1972 = vadd.f32 %v1971, 1.0
    %v1973 = vrcp.pop %v1972
    %v1974 = vmul.f32 %v1972, %v1973
    %v1975 = vsub.f32 1.0, %v1974
    %v1976 = vmul.f32 %v1973, %v1975
    %v1977 = vadd.f32 %v1973, %v1976
    %vm1978 = vweird.f32 %v1972
    %vm1979 = vweird.f32 %v1973
    %vm1980 = vmor %vm1978, %vm1979
    %v1981 = vsel %vm1980, %v1973, %v1977
    %v1982 = vand.u32 2147483647, %v1972
    %vm1983 = vcmp.eq.f32.partialorder %v1982, 8.507059e+37
    %v1984 = vand.u32 %v1972, 2147483648
    %v1985 = vor.u32 1.1754944e-38, %v1984
    %v1986 = vsel %vm1983, %v1985, %v1981
    %v1987 = vmul.f32 1.0, %v1986
    %v1988 = vtanh.pop %v1968
    %v1990 = vrot.slane %v1855, 2
    %v1992 = vmul.f32 %v1987, %v1990
    %1994 = vrot.lane.b32.xlu0 %v1988, 64
    %v1995 = vpop.permute.xlu0 %1994
    %v1997 = vmul.f32 %v1987, %v1995
    %1999 = vrot.lane.b32.xlu0 %v1997, 32
    %v2000 = vpop.permute.xlu0 %1999
    %v2002 = vadd.f32 %v1992, %v2000
    %v2003 = vtanh.pop %v2002
    %2005 = vrot.lane.b32.xlu0 %v2003, 64
    %v2006 = vpop.permute.xlu0 %2005
    %v2008 = vmul.f32 %v1987, %v2006
    %2010 = vrot.lane.b32.xlu0 %v2008, 32
    %v2011 = vpop.permute.xlu0 %2010
    %2013 = vst.msk [vmem:[#allocation4] sm:$0x3] %vm902, %v2011
    %v2014 = vld [vmem:[#allocation3] sm:$0xff]
    %v2015 = vld [vmem:[#allocation3 + $0x8] sm:$0xff]
    %v2016 = vld [vmem:[%s11] sm:$0xff]
    %v2017 = vld [vmem:[%s11 + $0x8] sm:$0xff]
    %v2018 = vld [vmem:[%s11 + $0x10] sm:$0xff]
    %v2019 = vld [vmem:[%s11 + $0x18] sm:$0xff]
    %v2020 = vld [vmem:[%s11 + $0x20] sm:$0xff]
    %v2021 = vld [vmem:[%s11 + $0x28] sm:$0xff]
    %v2022 = vld [vmem:[%s11 + $0x30] sm:$0xff]
    %v2023 = vld [vmem:[%s11 + $0x38] sm:$0xff]
    %v2024 = vld [vmem:[%s11 + $0x40] sm:$0xff]
    %v2025 = vld [vmem:[%s11 + $0x48] sm:$0xff]
    %v2026 = vld [vmem:[%s11 + $0x50] sm:$0xff]
    %v2027 = vld [vmem:[%s11 + $0x58] sm:$0xff]
    %v2028 = vld [vmem:[#allocation4] sm:$0xff]
    %v2029 = vld [vmem:[#allocation4 + $0x8] sm:$0xff]
    %v2030 = vld [vmem:[#allocation9] sm:$0xff]
    %v2031 = vld [vmem:[#allocation9 + $0x8] sm:$0xff]
    %v2032 = vld [vmem:[#allocation9 + $0x10] sm:$0xff]
    %v2033 = vld [vmem:[#allocation9 + $0x18] sm:$0xff]
    %v2034 = vld [vmem:[#allocation9 + $0x20] sm:$0xff]
    %v2035 = vld [vmem:[#allocation9 + $0x28] sm:$0xff]
    %v2036 = vld [vmem:[#allocation9 + $0x30] sm:$0xff]
    %v2037 = vld [vmem:[#allocation9 + $0x38] sm:$0xff]
    %v2038 = vld [vmem:[#allocation9 + $0x40] sm:$0xff]
    %v2039 = vld [vmem:[#allocation9 + $0x48] sm:$0xff]
    %v2040 = vld [vmem:[#allocation9 + $0x50] sm:$0xff]
    %v2041 = vld [vmem:[#allocation9 + $0x58] sm:$0xff]
    %v2043 = vsel %vm832, %v2028, 0
    %v2046 = vsel %vm832, %v2029, 0
    %2048 = vmatpush.msra.mxu0 0.0
    %2049 = vmatpush.msra.mxu0 0.0
    %2050 = vmatpush.msra.mxu0 0.0
    %2051 = vmatpush.msra.mxu0 0.0
    %2052 = vmatpush.msra.mxu0 0.0
    %2053 = vmatpush.msra.mxu0 0.0
    %2054 = vmatpush.msra.mxu0 0.0
    %2055 = vmatpush.msra.mxu0 0.0
    %2056 = vmatpush.msra.mxu0 0.0
    %2057 = vmatpush.msra.mxu0 0.0
    %2058 = vmatpush.msra.mxu0 0.0
    %2059 = vmatpush.msra.mxu0 0.0
    %2060 = vmatpush.msra.mxu0 %v2039
    %2061 = vmatpush.msra.mxu0 %v2036
    %2062 = vmatpush.msra.mxu0 %v2033
    %2063 = vmatpush.msra.mxu0 %v2030
    %2064 = vmatmul.f32.gmra.mxu0 %v2043
    %v2065 = vpop.f32.mrf.mxu0
    %v2066 = vadd.f32 0.0, %v2065
    %2067 = vmatmul.f32.gmra.mxu0 %v2046
    %v2068 = vpop.f32.mrf.mxu0
    %v2069 = vadd.f32 0.0, %v2068
    %2070 = vdwg.mxu0
    %2071 = vmatpush.msra.mxu0 0.0
    %2072 = vmatpush.msra.mxu0 0.0
    %2073 = vmatpush.msra.mxu0 0.0
    %2074 = vmatpush.msra.mxu0 0.0
    %2075 = vmatpush.msra.mxu0 0.0
    %2076 = vmatpush.msra.mxu0 0.0
    %2077 = vmatpush.msra.mxu0 0.0
    %2078 = vmatpush.msra.mxu0 0.0
    %2079 = vmatpush.msra.mxu0 0.0
    %2080 = vmatpush.msra.mxu0 0.0
    %2081 = vmatpush.msra.mxu0 0.0
    %2082 = vmatpush.msra.mxu0 0.0
    %2083 = vmatpush.msra.mxu0 %v2040
    %2084 = vmatpush.msra.mxu0 %v2037
    %2085 = vmatpush.msra.mxu0 %v2034
    %2086 = vmatpush.msra.mxu0 %v2031
    %2087 = vmatmul.f32.gmra.mxu0 %v2043
    %v2088 = vpop.f32.mrf.mxu0
    %v2089 = vadd.f32 0.0, %v2088
    %2090 = vmatmul.f32.gmra.mxu0 %v2046
    %v2091 = vpop.f32.mrf.mxu0
    %v2092 = vadd.f32 0.0, %v2091
    %2093 = vdwg.mxu0
    %2094 = vmatpush.msra.mxu0 0.0
    %2095 = vmatpush.msra.mxu0 0.0
    %2096 = vmatpush.msra.mxu0 0.0
    %2097 = vmatpush.msra.mxu0 0.0
    %2098 = vmatpush.msra.mxu0 0.0
    %2099 = vmatpush.msra.mxu0 0.0
    %2100 = vmatpush.msra.mxu0 0.0
    %2101 = vmatpush.msra.mxu0 0.0
    %2102 = vmatpush.msra.mxu0 0.0
    %2103 = vmatpush.msra.mxu0 0.0
    %2104 = vmatpush.msra.mxu0 0.0
    %2105 = vmatpush.msra.mxu0 0.0
    %2106 = vmatpush.msra.mxu0 %v2041
    %2107 = vmatpush.msra.mxu0 %v2038
    %2108 = vmatpush.msra.mxu0 %v2035
    %2109 = vmatpush.msra.mxu0 %v2032
    %2110 = vmatmul.f32.gmra.mxu0 %v2043
    %v2111 = vpop.f32.mrf.mxu0
    %v2112 = vadd.f32 0.0, %v2111
    %2113 = vmatmul.f32.gmra.mxu0 %v2046
    %v2114 = vpop.f32.mrf.mxu0
    %v2115 = vadd.f32 0.0, %v2114
    %2116 = vdwg.mxu0
    %v2118 = vsel %vm832, %v2014, 0
    %v2121 = vsel %vm832, %v2015, 0
    %2123 = vmatpush.msra.mxu0 0.0
    %2124 = vmatpush.msra.mxu0 0.0
    %2125 = vmatpush.msra.mxu0 0.0
    %2126 = vmatpush.msra.mxu0 0.0
    %2127 = vmatpush.msra.mxu0 0.0
    %2128 = vmatpush.msra.mxu0 0.0
    %2129 = vmatpush.msra.mxu0 0.0
    %2130 = vmatpush.msra.mxu0 0.0
    %2131 = vmatpush.msra.mxu0 0.0
    %2132 = vmatpush.msra.mxu0 0.0
    %2133 = vmatpush.msra.mxu0 0.0
    %2134 = vmatpush.msra.mxu0 0.0
    %2135 = vmatpush.msra.mxu0 %v2025
    %2136 = vmatpush.msra.mxu0 %v2022
    %2137 = vmatpush.msra.mxu0 %v2019
    %2138 = vmatpush.msra.mxu0 %v2016
    %2139 = vmatmul.f32.gmra.mxu0 %v2118
    %v2140 = vpop.f32.mrf.mxu0
    %v2141 = vadd.f32 %v2066, %v2140
    %2142 = vmatmul.f32.gmra.mxu0 %v2121
    %v2143 = vpop.f32.mrf.mxu0
    %v2144 = vadd.f32 %v2069, %v2143
    %2145 = vdwg.mxu0
    %2146 = vmatpush.msra.mxu0 0.0
    %2147 = vmatpush.msra.mxu0 0.0
    %2148 = vmatpush.msra.mxu0 0.0
    %2149 = vmatpush.msra.mxu0 0.0
    %2150 = vmatpush.msra.mxu0 0.0
    %2151 = vmatpush.msra.mxu0 0.0
    %2152 = vmatpush.msra.mxu0 0.0
    %2153 = vmatpush.msra.mxu0 0.0
    %2154 = vmatpush.msra.mxu0 0.0
    %2155 = vmatpush.msra.mxu0 0.0
    %2156 = vmatpush.msra.mxu0 0.0
    %2157 = vmatpush.msra.mxu0 0.0
    %2158 = vmatpush.msra.mxu0 %v2026
    %2159 = vmatpush.msra.mxu0 %v2023
    %2160 = vmatpush.msra.mxu0 %v2020
    %2161 = vmatpush.msra.mxu0 %v2017
    %2162 = vmatmul.f32.gmra.mxu0 %v2118
    %v2163 = vpop.f32.mrf.mxu0
    %v2164 = vadd.f32 %v2089, %v2163
    %2165 = vmatmul.f32.gmra.mxu0 %v2121
    %v2166 = vpop.f32.mrf.mxu0
    %v2167 = vadd.f32 %v2092, %v2166
    %2168 = vdwg.mxu0
    %2169 = vmatpush.msra.mxu0 0.0
    %2170 = vmatpush.msra.mxu0 0.0
    %2171 = vmatpush.msra.mxu0 0.0
    %2172 = vmatpush.msra.mxu0 0.0
    %2173 = vmatpush.msra.mxu0 0.0
    %2174 = vmatpush.msra.mxu0 0.0
    %2175 = vmatpush.msra.mxu0 0.0
    %2176 = vmatpush.msra.mxu0 0.0
    %2177 = vmatpush.msra.mxu0 0.0
    %2178 = vmatpush.msra.mxu0 0.0
    %2179 = vmatpush.msra.mxu0 0.0
    %2180 = vmatpush.msra.mxu0 0.0
    %2181 = vmatpush.msra.mxu0 %v2027
    %2182 = vmatpush.msra.mxu0 %v2024
    %2183 = vmatpush.msra.mxu0 %v2021
    %2184 = vmatpush.msra.mxu0 %v2018
    %2185 = vmatmul.f32.gmra.mxu0 %v2118
    %v2186 = vpop.f32.mrf.mxu0
    %v2187 = vadd.f32 %v2112, %v2186
    %2188 = vmatmul.f32.gmra.mxu0 %v2121
    %v2189 = vpop.f32.mrf.mxu0
    %v2190 = vadd.f32 %v2115, %v2189
    %2191 = vdwg.mxu0
    %v2192 = vld [vmem:[%s13] sm:$0x7]
    %v2194 = vperm.slane %v2192, 0
    %v2195 = vperm.slane %v2192, 1
    %v2196 = vperm.slane %v2192, 2
    %v2200 = vadd.f32 %v2141, %v2194
    %v2201 = vadd.f32 %v2164, %v2195
    %v2202 = vadd.f32 %v2187, %v2196
    %v2203 = vadd.f32 %v2144, %v2194
    %v2204 = vadd.f32 %v2167, %v2195
    %v2205 = vadd.f32 %v2190, %v2196
    %v2206 = vmax.f32 %v2200, 0.0
    %v2207 = vmax.f32 %v2201, 0.0
    %v2208 = vmax.f32 %v2202, 0.0
    %v2209 = vmax.f32 %v2203, 0.0
    %v2210 = vmax.f32 %v2204, 0.0
    %v2211 = vmax.f32 %v2205, 0.0
    %v2212 = vld [vmem:[%s14] sm:$0xff]
    %v2213 = vld [vmem:[%s14 + $0x8] sm:$0xff]
    %v2214 = vld [vmem:[%s14 + $0x10] sm:$0xff]
    %v2215 = vld [vmem:[%s14 + $0x18] sm:$0xff]
    %v2216 = vld [vmem:[%s14 + $0x20] sm:$0xff]
    %v2217 = vld [vmem:[%s14 + $0x28] sm:$0xff]
    %v2218 = vld [vmem:[%s14 + $0x30] sm:$0xff]
    %v2219 = vld [vmem:[%s14 + $0x38] sm:$0xff]
    %v2220 = vld [vmem:[%s14 + $0x40] sm:$0xff]
    %v2221 = vld [vmem:[%s14 + $0x48] sm:$0xff]
    %v2222 = vld [vmem:[%s14 + $0x50] sm:$0xff]
    %v2223 = vld [vmem:[%s14 + $0x58] sm:$0xff]
    %v2224 = vld [vmem:[%s14 + $0x60] sm:$0xff]
    %v2225 = vld [vmem:[%s14 + $0x68] sm:$0xff]
    %v2226 = vld [vmem:[%s14 + $0x70] sm:$0xff]
    %v2227 = vld [vmem:[%s14 + $0x78] sm:$0xff]
    %v2228 = vld [vmem:[%s14 + $0x80] sm:$0xff]
    %v2229 = vld [vmem:[%s14 + $0x88] sm:$0xff]
    %v2230 = vld [vmem:[%s14 + $0x90] sm:$0xff]
    %v2231 = vld [vmem:[%s14 + $0x98] sm:$0xff]
    %v2232 = vld [vmem:[%s14 + $0xa0] sm:$0xff]
    %v2233 = vld [vmem:[%s14 + $0xa8] sm:$0xff]
    %v2234 = vld [vmem:[%s14 + $0xb0] sm:$0xff]
    %v2235 = vld [vmem:[%s14 + $0xb8] sm:$0xff]
    %v2236 = vld [vmem:[%s14 + $0xc0] sm:$0xff]
    %v2237 = vld [vmem:[%s14 + $0xc8] sm:$0xff]
    %v2238 = vld [vmem:[%s14 + $0xd0] sm:$0xff]
    %v2239 = vld [vmem:[%s14 + $0xd8] sm:$0xff]
    %v2240 = vld [vmem:[%s14 + $0xe0] sm:$0xff]
    %v2241 = vld [vmem:[%s14 + $0xe8] sm:$0xff]
    %v2242 = vld [vmem:[%s14 + $0xf0] sm:$0xff]
    %v2243 = vld [vmem:[%s14 + $0xf8] sm:$0xff]
    %v2244 = vld [vmem:[%s14 + $0x100] sm:$0xff]
    %v2245 = vld [vmem:[%s14 + $0x108] sm:$0xff]
    %v2246 = vld [vmem:[%s14 + $0x110] sm:$0xff]
    %v2247 = vld [vmem:[%s14 + $0x118] sm:$0xff]
    %v2248 = vld [vmem:[%s14 + $0x120] sm:$0xff]
    %v2249 = vld [vmem:[%s14 + $0x128] sm:$0xf]
    %v2250 = vld [vmem:[%s15] sm:$0x1]
    %v2252 = vperm.slane %v2250, 0
    %v2255 = vsel %vm502, %v2208, 0
    %v2258 = vsel %vm502, %v2211, 0
    %v2261 = vsel %vm164, %v2249, 0
    %2263 = vmatpush.msra.mxu0 %v2227
    %2264 = vmatpush.msra.mxu0 %v2226
    %2265 = vmatpush.msra.mxu0 %v2225
    %2266 = vmatpush.msra.mxu0 %v2224
    %2267 = vmatpush.msra.mxu0 %v2223
    %2268 = vmatpush.msra.mxu0 %v2222
    %2269 = vmatpush.msra.mxu0 %v2221
    %2270 = vmatpush.msra.mxu0 %v2220
    %2271 = vmatpush.msra.mxu0 %v2219
    %2272 = vmatpush.msra.mxu0 %v2218
    %2273 = vmatpush.msra.mxu0 %v2217
    %2274 = vmatpush.msra.mxu0 %v2216
    %2275 = vmatpush.msra.mxu0 %v2215
    %2276 = vmatpush.msra.mxu0 %v2214
    %2277 = vmatpush.msra.mxu0 %v2213
    %2278 = vmatpush.msra.mxu0 %v2212
    %2279 = vmatmul.f32.gmra.mxu0 %v2206
    %v2280 = vpop.f32.mrf.mxu0
    %v2281 = vadd.f32 %v2252, %v2280
    %2282 = vmatmul.f32.gmra.mxu0 %v2209
    %v2283 = vpop.f32.mrf.mxu0
    %v2284 = vadd.f32 %v2252, %v2283
    %2285 = vdwg.mxu0
    %2286 = vmatpush.msra.mxu0 %v2243
    %2287 = vmatpush.msra.mxu0 %v2242
    %2288 = vmatpush.msra.mxu0 %v2241
    %2289 = vmatpush.msra.mxu0 %v2240
    %2290 = vmatpush.msra.mxu0 %v2239
    %2291 = vmatpush.msra.mxu0 %v2238
    %2292 = vmatpush.msra.mxu0 %v2237
    %2293 = vmatpush.msra.mxu0 %v2236
    %2294 = vmatpush.msra.mxu0 %v2235
    %2295 = vmatpush.msra.mxu0 %v2234
    %2296 = vmatpush.msra.mxu0 %v2233
    %2297 = vmatpush.msra.mxu0 %v2232
    %2298 = vmatpush.msra.mxu0 %v2231
    %2299 = vmatpush.msra.mxu0 %v2230
    %2300 = vmatpush.msra.mxu0 %v2229
    %2301 = vmatpush.msra.mxu0 %v2228
    %2302 = vmatmul.f32.gmra.mxu0 %v2207
    %v2303 = vpop.f32.mrf.mxu0
    %v2304 = vadd.f32 %v2281, %v2303
    %2305 = vmatmul.f32.gmra.mxu0 %v2210
    %v2306 = vpop.f32.mrf.mxu0
    %v2307 = vadd.f32 %v2284, %v2306
    %2308 = vdwg.mxu0
    %2309 = vmatpush.msra.mxu0 0.0
    %2310 = vmatpush.msra.mxu0 0.0
    %2311 = vmatpush.msra.mxu0 0.0
    %2312 = vmatpush.msra.mxu0 0.0
    %2313 = vmatpush.msra.mxu0 0.0
    %2314 = vmatpush.msra.mxu0 0.0
    %2315 = vmatpush.msra.mxu0 0.0
    %2316 = vmatpush.msra.mxu0 0.0
    %2317 = vmatpush.msra.mxu0 0.0
    %2318 = vmatpush.msra.mxu0 0.0
    %2319 = vmatpush.msra.mxu0 %v2261
    %2320 = vmatpush.msra.mxu0 %v2248
    %2321 = vmatpush.msra.mxu0 %v2247
    %2322 = vmatpush.msra.mxu0 %v2246
    %2323 = vmatpush.msra.mxu0 %v2245
    %2324 = vmatpush.msra.mxu0 %v2244
    %2325 = vmatmul.f32.gmra.mxu0 %v2255
    %v2326 = vpop.f32.mrf.mxu0
    %v2327 = vadd.f32 %v2304, %v2326
    %2328 = vmatmul.f32.gmra.mxu0 %v2258
    %v2329 = vpop.f32.mrf.mxu0
    %v2330 = vadd.f32 %v2307, %v2329
    %2331 = vdwg.mxu0
    %v2332 = vld [vmem:[%s16] sm:$0xff]
    %v2333 = vld [vmem:[%s16 + $0x8] sm:$0xff]
    %vm2334 = vcmask 130048
    %v2336 = vsel %vm2334, %v2332, 0
    %v2339 = vsel %vm2334, %v2333, 0
    %2341 = vmatpush.msra.mxu0 0.0
    %2342 = vmatpush.msra.mxu0 0.0
    %2343 = vmatpush.msra.mxu0 0.0
    %2344 = vmatpush.msra.mxu0 0.0
    %2345 = vmatpush.msra.mxu0 0.0
    %2346 = vmatpush.msra.mxu0 0.0
    %2347 = vmatpush.msra.mxu0 0.0
    %2348 = vmatpush.msra.mxu0 0.0
    %2349 = vmatpush.msra.mxu0 0.0
    %2350 = vmatpush.msra.mxu0 0.0
    %2351 = vmatpush.msra.mxu0 0.0
    %2352 = vmatpush.msra.mxu0 0.0
    %2353 = vmatpush.msra.mxu0 0.0
    %2354 = vmatpush.msra.mxu0 0.0
    %2355 = vmatpush.msra.mxu0 %v2330
    %2356 = vmatpush.msra.mxu0 %v2327
    %2357 = vmatmul.f32.gmra.mxu0 %v2336
    %v2358 = vpop.f32.mrf.mxu0
    %v2359 = vadd.f32 0.0, %v2358
    %2360 = vmatmul.f32.gmra.mxu0 %v2339
    %v2361 = vpop.f32.mrf.mxu0
    %v2362 = vadd.f32 0.0, %v2361
    %2363 = vdwg.mxu0
    %vm2364 = vcmask 23552
    %2365 = vst.msk [vmem:[%s17] sm:$0xff] %vm2364, %v2359
    %2366 = vst.msk [vmem:[%s17 + $0x8] sm:$0xff] %vm2364, %v2362
    // Predicated region
    $region82: #{en_labeler_forward.1} parent=1 // pred_check
      _
    $region83: #{en_labeler_forward.1} parent=1 // pred_check_branch
      %2368 = sbr.rel (0) target = $region85
    $region84: #{en_labeler_forward.1} parent=1 // pred_region
      _
    $region85: #{en_labeler_forward.1} parent=1 // pred_fallthru
      _
    // Predicated region
    $region86: #{en_labeler_forward.1} parent=1 // pred_check
      _
    $region87: #{en_labeler_forward.1} parent=1 // pred_check_branch
      %2370 = sbr.rel (0) target = $region89
    $region88: #{en_labeler_forward.1} parent=1 // pred_region
      _
    $region89: #{en_labeler_forward.1} parent=1 // pred_fallthru
      _
    %2371 = vsyncpa [#allocation6], 1
    %2372 = vsyncpa [#allocation8], 1

</llo_original>
